<compile_context>
chip_gen: v7x
topology: tpu7x:2x2x1
jax: 0.10.0
libtpu: 0.0.40
codegen_flags: <defaults>
</compile_context>

<pallas_src>
import functools

import jax
import jax.numpy as jnp
from jax.experimental import pallas as pl
from jax.experimental.pallas import tpu as pltpu

EPS = 1e-5        # PyTorch BatchNorm1d default eps
LANE = 128        # TPU lane width


def _round_up(x, m):
    return (x + m - 1) // m * m


# ---------------------------- Pallas kernel -----------------------------

def _relic_tower_kernel(patches_ref, pool_ref, cw_ref, cb_ref,
                        w1_ref, g_ref, beta_ref, w2_ref, out_ref,
                        *, views, eps):
    # patches: (2B*HW, Kpad)  both views, im2col'd, K zero-padded to a lane multiple
    # pool:    (2B, 2B*HW)    block-diagonal 1/HW pooling matrix
    # cw:      (Kpad, Cout)   conv weight (zero-padded rows);  cb: (1, Cout)
    # w1:      (Cout, Hdim)   g/beta: (1, Hdim)                w2: (Hdim, Dpad)
    # out:     (2B, Dpad)

    # --- encoder: conv as one big MXU matmul over all views * all pixels ---
    y = jnp.dot(patches_ref[...], cw_ref[...], preferred_element_type=jnp.float32)
    y = jnp.maximum(y + cb_ref[...], 0.0)                       # bias + ReLU (VPU)

    # Global average pool on the MXU (pooling matrix carries the 1/HW factor).
    feat = jnp.dot(pool_ref[...], y, preferred_element_type=jnp.float32)   # (2B, Cout)

    # --- MLPHead: Linear(no bias) -> BatchNorm1d -> ReLU -> Linear(no bias) ---
    h = jnp.dot(feat, w1_ref[...], preferred_element_type=jnp.float32)     # (2B, Hdim)

    nb = h.shape[0]
    b = nb // views
    parts = []
    for v in range(views):                 # static unroll; BN stats per view (B rows)
        hv = h[v * b:(v + 1) * b, :]
        mu = jnp.mean(hv, axis=0, keepdims=True)
        var = jnp.mean((hv - mu) ** 2, axis=0, keepdims=True)   # biased (torch train)
        parts.append((hv - mu) * jax.lax.rsqrt(var + eps))
    h = jnp.concatenate(parts, axis=0)
    h = jnp.maximum(h * g_ref[...] + beta_ref[...], 0.0)        # affine + ReLU

    out_ref[...] = jnp.dot(h, w2_ref[...], preferred_element_type=jnp.float32)


# ------------------------------ glue (JAX) ------------------------------

def im2col(x, kh=3, kw=3, pad=1):
    # x: (N, C, H, W) NCHW -> (N, H*W, C*kh*kw), stride 1, 'same' padding.
    n, c, h, w = x.shape
    xp = jnp.pad(x, ((0, 0), (0, 0), (pad, pad), (pad, pad)))
    cols = []
    for i in range(kh):
        for j in range(kw):
            cols.append(xp[:, :, i:i + h, j:j + w])             # (N, C, H, W)
    p = jnp.stack(cols, axis=2)                                 # (N, C, kh*kw, H, W)
    p = p.reshape(n, c * kh * kw, h * w)                        # (c, ki, kj) == torch flatten
    return jnp.transpose(p, (0, 2, 1))                          # (N, H*W, C*kh*kw)


def _flatten_conv_w(conv_w, kpad):
    cout = conv_w.shape[0]
    w = conv_w.reshape(cout, -1).T                              # (K, Cout)
    return jnp.pad(w, ((0, kpad - w.shape[0]), (0, 0)))         # (Kpad, Cout)


def relic_forward(x1, x2, online_params, target_params):
    B, C, H, W = x1.shape
    views = 2
    nb = views * B
    hw = H * W
    m = nb * hw

    # im2col both views at once -> (2B*HW, K); pad K up to a lane multiple.
    x = jnp.concatenate([x1, x2], axis=0)                       # (2B, C, H, W)
    patches = im2col(x).reshape(m, C * 9)
    k = patches.shape[1]
    kpad = _round_up(max(k, LANE), LANE)
    patches = jnp.pad(patches, ((0, 0), (0, kpad - k)))

    # Block-diagonal global-average-pool matrix (2B, 2B*HW).
    pool = jnp.repeat(jnp.eye(nb, dtype=jnp.float32), hw, axis=1) / float(hw)

    cout = online_params["conv_w"].shape[0]
    hdim = online_params["w1"].shape[1]
    dout = online_params["w2"].shape[1]
    dpad = _round_up(max(dout, LANE), LANE)

    def prep(p):
        return (
            _flatten_conv_w(p["conv_w"], kpad),                 # (Kpad, Cout)
            p["conv_b"].reshape(1, cout),
            p["w1"],
            p["bn_gamma"].reshape(1, hdim),
            p["bn_beta"].reshape(1, hdim),
            jnp.pad(p["w2"], ((0, 0), (0, dpad - dout))),       # (Hdim, Dpad)
        )

    # Stack online/target along a leading tower axis, iterated by the grid.
    cw, cb, w1, g, beta, w2 = [
        jnp.stack(z, axis=0) for z in zip(prep(online_params), prep(target_params))
    ]
    n_towers = 2

    kernel = functools.partial(_relic_tower_kernel, views=views, eps=EPS)

    shared = lambda t: (0, 0)          # view/patch data: identical for both towers
    per_tower = lambda t: (t, 0, 0)    # weights / output: one block per tower

    flops = 2 * n_towers * (m * kpad * cout + nb * m * cout
                            + nb * cout * hdim + nb * hdim * dpad)
    bytes_accessed = 4 * (m * kpad + nb * m
                          + n_towers * (kpad * cout + cout + cout * hdim
                                        + 2 * hdim + hdim * dpad + nb * dpad))
    cost = pl.CostEstimate(flops=flops,
                           transcendentals=n_towers * views * hdim,
                           bytes_accessed=bytes_accessed)

    out = pl.pallas_call(
        kernel,
        out_shape=jax.ShapeDtypeStruct((n_towers, nb, dpad), jnp.float32),
        grid=(n_towers,),
        in_specs=[
            pl.BlockSpec((m, kpad), shared),                    # patches (shared)
            pl.BlockSpec((nb, m), shared),                      # pool matrix (shared)
            pl.BlockSpec((None, kpad, cout), per_tower),        # conv weight
            pl.BlockSpec((None, 1, cout), per_tower),           # conv bias
            pl.BlockSpec((None, cout, hdim), per_tower),        # w1
            pl.BlockSpec((None, 1, hdim), per_tower),           # bn gamma
            pl.BlockSpec((None, 1, hdim), per_tower),           # bn beta
            pl.BlockSpec((None, hdim, dpad), per_tower),        # w2 (lane-padded)
        ],
        out_specs=pl.BlockSpec((None, nb, dpad), per_tower),
        compiler_params=pltpu.CompilerParams(
            dimension_semantics=("parallel",)),                 # towers -> 2 TCs on v7x
        cost_estimate=cost,
    )(patches, pool, cw, cb, w1, g, beta, w2)

    o1 = out[0, :B, :dout]
    o2 = out[0, B:, :dout]
    # target tower: torch.no_grad() + detach  ->  stop_gradient
    t1 = jax.lax.stop_gradient(out[1, :B, :dout])
    t2 = jax.lax.stop_gradient(out[1, B:, :dout])
    return o1, o2, t1, t2


def init_params(key, c_in=4, c_out=32, mlp_hidden=512, mlp_out=64):
    k0, k1, k2, k3 = jax.random.split(key, 4)
    return {
        # encoder: Conv2d(c_in, c_out, 3, padding=1) (with bias)
        "conv_w": jax.random.normal(k0, (c_out, c_in, 3, 3), jnp.float32) * 0.1,
        "conv_b": jax.random.normal(k1, (c_out,), jnp.float32) * 0.1,
        # MLPHead: Linear(c_out, hidden, bias=False) -> BN1d -> ReLU -> Linear(hidden, out, bias=False)
        "w1": jax.random.normal(k2, (c_out, mlp_hidden), jnp.float32) * 0.1,
        "bn_gamma": jnp.ones((mlp_hidden,), jnp.float32),
        "bn_beta": jnp.zeros((mlp_hidden,), jnp.float32),
        "w2": jax.random.normal(k3, (mlp_hidden, mlp_out), jnp.float32) * 0.1,
    }


if __name__ == "__main__":
    key = jax.random.PRNGKey(0)
    kx1, kx2, kp = jax.random.split(key, 3)

    B, C, H, W = 2, 4, 16, 16
    x1 = jax.random.normal(kx1, (B, C, H, W), jnp.float32)
    x2 = jax.random.normal(kx2, (B, C, H, W), jnp.float32)

    online_params = init_params(kp)
    # target_encoder = copy.deepcopy(online_encoder): identical weights at init
    target_params = jax.tree_util.tree_map(lambda a: a.copy(), online_params)

    # ReLIC scalar parameters tau / b (nn.Parameter, unused in forward; kept for parity)
    tau = jnp.zeros((), jnp.float32)   # log(1.0)
    b = jnp.zeros((), jnp.float32)

    o1, o2, t1, t2 = jax.block_until_ready(
        jax.jit(relic_forward)(x1, x2, online_params, target_params))

    assert o1.shape == (B, 64) and o2.shape == (B, 64)
    assert t1.shape == (B, 64) and t2.shape == (B, 64)
    # target tower has identical weights at init -> identical outputs
    assert jnp.allclose(o1, t1, atol=1e-5) and jnp.allclose(o2, t2, atol=1e-5)
    assert jnp.all(jnp.isfinite(o1)) and jnp.all(jnp.isfinite(o2))
    print("KERNEL_OK")
</pallas_src>

<mosaic_0001>
module attributes {stable_mosaic.version = 11 : i64} {
  func.func @_relic_tower_kernel(%arg0: i32, %arg1: memref<1024x128xf32, #tpu.memory_space<vmem>>, %arg2: memref<4x1024xf32, #tpu.memory_space<vmem>>, %arg3: memref<1x128x32xf32, #tpu.memory_space<vmem>>, %arg4: memref<1x1x32xf32, #tpu.memory_space<vmem>>, %arg5: memref<1x32x512xf32, #tpu.memory_space<vmem>>, %arg6: memref<1x1x512xf32, #tpu.memory_space<vmem>>, %arg7: memref<1x1x512xf32, #tpu.memory_space<vmem>>, %arg8: memref<1x512x128xf32, #tpu.memory_space<vmem>>, %arg9: memref<1x4x128xf32, #tpu.memory_space<vmem>>) attributes {dimension_semantics = [#tpu.dimension_semantics<parallel>], iteration_bounds = array<i64: 2>, scalar_prefetch = 0 : i64, scratch_operands = 0 : i64, tpu.core_type = #tpu.core_type<tc>, window_params = [{pipeline_mode = #tpu.pipeline_mode<synchronous>, transform_indices = @transform_0, window_bounds = array<i64: 1024, 128>}, {pipeline_mode = #tpu.pipeline_mode<synchronous>, transform_indices = @transform_1, window_bounds = array<i64: 4, 1024>}, {transform_indices = @transform_2, window_bounds = array<i64: 1, 128, 32>}, {transform_indices = @transform_3, window_bounds = array<i64: 1, 1, 32>}, {transform_indices = @transform_4, window_bounds = array<i64: 1, 32, 512>}, {transform_indices = @transform_5, window_bounds = array<i64: 1, 1, 512>}, {transform_indices = @transform_6, window_bounds = array<i64: 1, 1, 512>}, {transform_indices = @transform_7, window_bounds = array<i64: 1, 512, 128>}, {transform_indices = @transform_8, window_bounds = array<i64: 1, 4, 128>}]} {
    %c0 = arith.constant 0 : index
    %c0_0 = arith.constant 0 : index
    %0 = vector.load %arg1[%c0, %c0_0] : memref<1024x128xf32, #tpu.memory_space<vmem>>, vector<1024x128xf32>
    %c0_1 = arith.constant 0 : index
    %c0_2 = arith.constant 0 : index
    %c0_3 = arith.constant 0 : index
    %1 = vector.load %arg3[%c0_1, %c0_2, %c0_3] : memref<1x128x32xf32, #tpu.memory_space<vmem>>, vector<1x128x32xf32>
    %2 = vector.shape_cast %1 : vector<1x128x32xf32> to vector<128x32xf32>
    %cst = arith.constant dense<0.000000e+00> : vector<1024x32xf32>
    %3 = tpu.matmul %0, %2, %cst {dimension_numbers = #tpu.dot_dimension_numbers<[1], [0], [0], [1], [0, 0, 1, 1], [], []>} : vector<1024x128xf32>, vector<128x32xf32>, vector<1024x32xf32> -> vector<1024x32xf32>
    %c0_4 = arith.constant 0 : index
    %c0_5 = arith.constant 0 : index
    %c0_6 = arith.constant 0 : index
    %4 = vector.load %arg4[%c0_4, %c0_5, %c0_6] : memref<1x1x32xf32, #tpu.memory_space<vmem>>, vector<1x1x32xf32>
    %5 = vector.shape_cast %4 : vector<1x1x32xf32> to vector<1x32xf32>
    %6 = vector.broadcast %5 : vector<1x32xf32> to vector<1024x32xf32>
    %7 = arith.addf %3, %6 : vector<1024x32xf32>
    %cst_7 = arith.constant 0.000000e+00 : f32
    %8 = vector.broadcast %cst_7 : f32 to vector<1024x32xf32>
    %9 = arith.maximumf %7, %8 : vector<1024x32xf32>
    %c0_8 = arith.constant 0 : index
    %c0_9 = arith.constant 0 : index
    %10 = vector.load %arg2[%c0_8, %c0_9] : memref<4x1024xf32, #tpu.memory_space<vmem>>, vector<4x1024xf32>
    %cst_10 = arith.constant dense<0.000000e+00> : vector<4x32xf32>
    %11 = tpu.matmul %10, %9, %cst_10 {dimension_numbers = #tpu.dot_dimension_numbers<[1], [0], [0], [1], [0, 0, 1, 1], [], []>} : vector<4x1024xf32>, vector<1024x32xf32>, vector<4x32xf32> -> vector<4x32xf32>
    %c0_11 = arith.constant 0 : index
    %c0_12 = arith.constant 0 : index
    %c0_13 = arith.constant 0 : index
    %12 = vector.load %arg5[%c0_11, %c0_12, %c0_13] : memref<1x32x512xf32, #tpu.memory_space<vmem>>, vector<1x32x512xf32>
    %13 = vector.shape_cast %12 : vector<1x32x512xf32> to vector<32x512xf32>
    %cst_14 = arith.constant dense<0.000000e+00> : vector<4x512xf32>
    %14 = tpu.matmul %11, %13, %cst_14 {dimension_numbers = #tpu.dot_dimension_numbers<[1], [0], [0], [1], [0, 0, 1, 1], [], []>} : vector<4x32xf32>, vector<32x512xf32>, vector<4x512xf32> -> vector<4x512xf32>
    %15 = vector.extract_strided_slice %14 {offsets = [0, 0], sizes = [2, 512], strides = [1, 1]} : vector<4x512xf32> to vector<2x512xf32>
    %cst_15 = arith.constant dense<0.000000e+00> : vector<512xf32>
    %16 = vector.multi_reduction <add>, %15, %cst_15 [0] : vector<2x512xf32> to vector<512xf32>
    %17 = vector.shape_cast %16 : vector<512xf32> to vector<1x512xf32>
    %cst_16 = arith.constant 2.000000e+00 : f32
    %18 = vector.broadcast %cst_16 : f32 to vector<1x512xf32>
    %19 = arith.divf %17, %18 : vector<1x512xf32>
    %20 = vector.broadcast %19 : vector<1x512xf32> to vector<2x512xf32>
    %21 = arith.subf %15, %20 : vector<2x512xf32>
    %22 = arith.mulf %21, %21 : vector<2x512xf32>
    %cst_17 = arith.constant dense<0.000000e+00> : vector<512xf32>
    %23 = vector.multi_reduction <add>, %22, %cst_17 [0] : vector<2x512xf32> to vector<512xf32>
    %24 = vector.shape_cast %23 : vector<512xf32> to vector<1x512xf32>
    %cst_18 = arith.constant 2.000000e+00 : f32
    %25 = vector.broadcast %cst_18 : f32 to vector<1x512xf32>
    %26 = arith.divf %24, %25 : vector<1x512xf32>
    %27 = vector.broadcast %19 : vector<1x512xf32> to vector<2x512xf32>
    %28 = arith.subf %15, %27 : vector<2x512xf32>
    %cst_19 = arith.constant 9.99999974E-6 : f32
    %29 = vector.broadcast %cst_19 : f32 to vector<1x512xf32>
    %30 = arith.addf %26, %29 : vector<1x512xf32>
    %31 = math.rsqrt %30 : vector<1x512xf32>
    %32 = vector.broadcast %31 : vector<1x512xf32> to vector<2x512xf32>
    %33 = arith.mulf %28, %32 : vector<2x512xf32>
    %34 = vector.extract_strided_slice %14 {offsets = [2, 0], sizes = [2, 512], strides = [1, 1]} : vector<4x512xf32> to vector<2x512xf32>
    %cst_20 = arith.constant dense<0.000000e+00> : vector<512xf32>
    %35 = vector.multi_reduction <add>, %34, %cst_20 [0] : vector<2x512xf32> to vector<512xf32>
    %36 = vector.shape_cast %35 : vector<512xf32> to vector<1x512xf32>
    %cst_21 = arith.constant 2.000000e+00 : f32
    %37 = vector.broadcast %cst_21 : f32 to vector<1x512xf32>
    %38 = arith.divf %36, %37 : vector<1x512xf32>
    %39 = vector.broadcast %38 : vector<1x512xf32> to vector<2x512xf32>
    %40 = arith.subf %34, %39 : vector<2x512xf32>
    %41 = arith.mulf %40, %40 : vector<2x512xf32>
    %cst_22 = arith.constant dense<0.000000e+00> : vector<512xf32>
    %42 = vector.multi_reduction <add>, %41, %cst_22 [0] : vector<2x512xf32> to vector<512xf32>
    %43 = vector.shape_cast %42 : vector<512xf32> to vector<1x512xf32>
    %cst_23 = arith.constant 2.000000e+00 : f32
    %44 = vector.broadcast %cst_23 : f32 to vector<1x512xf32>
    %45 = arith.divf %43, %44 : vector<1x512xf32>
    %46 = vector.broadcast %38 : vector<1x512xf32> to vector<2x512xf32>
    %47 = arith.subf %34, %46 : vector<2x512xf32>
    %cst_24 = arith.constant 9.99999974E-6 : f32
    %48 = vector.broadcast %cst_24 : f32 to vector<1x512xf32>
    %49 = arith.addf %45, %48 : vector<1x512xf32>
    %50 = math.rsqrt %49 : vector<1x512xf32>
    %51 = vector.broadcast %50 : vector<1x512xf32> to vector<2x512xf32>
    %52 = arith.mulf %47, %51 : vector<2x512xf32>
    %53 = tpu.concatenate %33, %52 in 0 : vector<2x512xf32>, vector<2x512xf32> -> vector<4x512xf32>
    %c0_25 = arith.constant 0 : index
    %c0_26 = arith.constant 0 : index
    %c0_27 = arith.constant 0 : index
    %54 = vector.load %arg6[%c0_25, %c0_26, %c0_27] : memref<1x1x512xf32, #tpu.memory_space<vmem>>, vector<1x1x512xf32>
    %55 = vector.shape_cast %54 : vector<1x1x512xf32> to vector<1x512xf32>
    %56 = vector.broadcast %55 : vector<1x512xf32> to vector<4x512xf32>
    %57 = arith.mulf %53, %56 : vector<4x512xf32>
    %c0_28 = arith.constant 0 : index
    %c0_29 = arith.constant 0 : index
    %c0_30 = arith.constant 0 : index
    %58 = vector.load %arg7[%c0_28, %c0_29, %c0_30] : memref<1x1x512xf32, #tpu.memory_space<vmem>>, vector<1x1x512xf32>
    %59 = vector.shape_cast %58 : vector<1x1x512xf32> to vector<1x512xf32>
    %60 = vector.broadcast %59 : vector<1x512xf32> to vector<4x512xf32>
    %61 = arith.addf %57, %60 : vector<4x512xf32>
    %cst_31 = arith.constant 0.000000e+00 : f32
    %62 = vector.broadcast %cst_31 : f32 to vector<4x512xf32>
    %63 = arith.maximumf %61, %62 : vector<4x512xf32>
    %c0_32 = arith.constant 0 : index
    %c0_33 = arith.constant 0 : index
    %c0_34 = arith.constant 0 : index
    %64 = vector.load %arg8[%c0_32, %c0_33, %c0_34] : memref<1x512x128xf32, #tpu.memory_space<vmem>>, vector<1x512x128xf32>
    %65 = vector.shape_cast %64 : vector<1x512x128xf32> to vector<512x128xf32>
    %cst_35 = arith.constant dense<0.000000e+00> : vector<4x128xf32>
    %66 = tpu.matmul %63, %65, %cst_35 {dimension_numbers = #tpu.dot_dimension_numbers<[1], [0], [0], [1], [0, 0, 1, 1], [], []>} : vector<4x512xf32>, vector<512x128xf32>, vector<4x128xf32> -> vector<4x128xf32>
    %c0_36 = arith.constant 0 : index
    %c0_37 = arith.constant 0 : index
    %c0_38 = arith.constant 0 : index
    %67 = vector.load %arg9[%c0_36, %c0_37, %c0_38] : memref<1x4x128xf32, #tpu.memory_space<vmem>>, vector<1x4x128xf32>
    %68 = vector.shape_cast %67 : vector<1x4x128xf32> to vector<4x128xf32>
    %69 = vector.shape_cast %66 : vector<4x128xf32> to vector<1x4x128xf32>
    tpu.vector_store %arg9[%c0_36, %c0_37, %c0_38], %69 {strides = array<i32>} : memref<1x4x128xf32, #tpu.memory_space<vmem>>, vector<1x4x128xf32>,
    return
  }
  func.func @transform_0(%arg0: i32) -> (i32, i32) {
    %c0_i32 = arith.constant 0 : i32
    %c0_i32_0 = arith.constant 0 : i32
    %c0_i32_1 = arith.constant 0 : i32
    return %c0_i32, %c0_i32_0 : i32, i32
  }
  func.func @transform_1(%arg0: i32) -> (i32, i32) {
    %c0_i32 = arith.constant 0 : i32
    %c0_i32_0 = arith.constant 0 : i32
    %c0_i32_1 = arith.constant 0 : i32
    return %c0_i32, %c0_i32_0 : i32, i32
  }
  func.func @transform_2(%arg0: i32) -> (i32, i32, i32) {
    %c0_i32 = arith.constant 0 : i32
    %c0_i32_0 = arith.constant 0 : i32
    %c0_i32_1 = arith.constant 0 : i32
    return %arg0, %c0_i32, %c0_i32_0 : i32, i32, i32
  }
  func.func @transform_3(%arg0: i32) -> (i32, i32, i32) {
    %c0_i32 = arith.constant 0 : i32
    %c0_i32_0 = arith.constant 0 : i32
    %c0_i32_1 = arith.constant 0 : i32
    return %arg0, %c0_i32, %c0_i32_0 : i32, i32, i32
  }
  func.func @transform_4(%arg0: i32) -> (i32, i32, i32) {
    %c0_i32 = arith.constant 0 : i32
    %c0_i32_0 = arith.constant 0 : i32
    %c0_i32_1 = arith.constant 0 : i32
    return %arg0, %c0_i32, %c0_i32_0 : i32, i32, i32
  }
  func.func @transform_5(%arg0: i32) -> (i32, i32, i32) {
    %c0_i32 = arith.constant 0 : i32
    %c0_i32_0 = arith.constant 0 : i32
    %c0_i32_1 = arith.constant 0 : i32
    return %arg0, %c0_i32, %c0_i32_0 : i32, i32, i32
  }
  func.func @transform_6(%arg0: i32) -> (i32, i32, i32) {
    %c0_i32 = arith.constant 0 : i32
    %c0_i32_0 = arith.constant 0 : i32
    %c0_i32_1 = arith.constant 0 : i32
    return %arg0, %c0_i32, %c0_i32_0 : i32, i32, i32
  }
  func.func @transform_7(%arg0: i32) -> (i32, i32, i32) {
    %c0_i32 = arith.constant 0 : i32
    %c0_i32_0 = arith.constant 0 : i32
    %c0_i32_1 = arith.constant 0 : i32
    return %arg0, %c0_i32, %c0_i32_0 : i32, i32, i32
  }
  func.func @transform_8(%arg0: i32) -> (i32, i32, i32) {
    %c0_i32 = arith.constant 0 : i32
    %c0_i32_0 = arith.constant 0 : i32
    %c0_i32_1 = arith.constant 0 : i32
    return %arg0, %c0_i32, %c0_i32_0 : i32, i32, i32
  }
}

</mosaic_0001>

<llo_original>
// kernel: relic_forward.1
$region0: #{relic_forward.1}
  #allocation0 [shape = 'u32[]', space=smem, size = 0x4, offset = 0x4, fixed_abs, tag = 'smem constant byte address 0x4 - core index']
  #allocation1 [shape = 'u32[144,128]{1,0:T(1,128)}', space=vmem, size = 0x12000, scoped, tag = 'internal scratch']
  %s0 = inlined_call_operand.vmem [shape: f32[1024,128], index: 0, kind: input, shape index: {}]
  %s1 = inlined_call_operand.vmem [shape: f32[4,1024], index: 1, kind: input, shape index: {}]
  %s2 = inlined_call_operand.vmem [shape: f32[2,128,32], index: 2, kind: input, shape index: {}]
  %s3 = inlined_call_operand.vmem [shape: f32[2,1,32], index: 3, kind: input, shape index: {}]
  %s4 = inlined_call_operand.vmem [shape: f32[2,32,512], index: 4, kind: input, shape index: {}]
  %s5 = inlined_call_operand.vmem [shape: f32[2,1,512], index: 5, kind: input, shape index: {}]
  %s6 = inlined_call_operand.vmem [shape: f32[2,1,512], index: 6, kind: input, shape index: {}]
  %s7 = inlined_call_operand.vmem [shape: f32[2,512,128], index: 7, kind: input, shape index: {}]
  %s8 = inlined_call_operand.vmem [shape: f32[2,4,128], index: 8, kind: output, shape index: {}]
  %s9 = sld [smem:[#allocation0]]
  $region65: #{relic_forward.1} parent=0
    _
  %s11 = ssub.s32 1, %s9
  %s12 = scalar_select 0, %s11, %s9
  loop: start=0, step=1, limit=4
  $region2: #{relic_forward.1} parent=0 // loop_pre_header
    _
  $region3: #{relic_forward.1} parent=0 // loop_header
    %s14 = sphi 0, %s18
    %p15 = scmp.ge.s32.totalorder %s14, 4
    %s22 = sphi 0, %s22
    %s24 = sphi 0, %s22
    %s25 = sphi 0, %s24
    %s39 = sphi 0, %s25
    %s43 = sphi 0, %s43
    %s45 = sphi 0, %s43
    %s46 = sphi 0, %s45
    %s60 = sphi 0, %s46
    %s66 = sphi 0, %s68
    %s69 = sphi 0, %s66
    %s70 = sphi 0, %s69
    %s86 = sphi 0, %s70
    %s92 = sphi 0, %s94
    %s95 = sphi 0, %s92
    %s96 = sphi 0, %s95
    %s112 = sphi 0, %s96
    %s118 = sphi 0, %s120
    %s121 = sphi 0, %s118
    %s122 = sphi 0, %s121
    %s138 = sphi 0, %s122
    %s144 = sphi 0, %s146
    %s147 = sphi 0, %s144
    %s148 = sphi 0, %s147
    %s164 = sphi 0, %s148
    %s170 = sphi 0, %s172
    %s173 = sphi 0, %s170
    %s174 = sphi 0, %s173
    %s190 = sphi 0, %s174
    %s196 = sphi 0, %s198
    %s199 = sphi 0, %s196
    %s200 = sphi 0, %s199
    %s216 = sphi 0, %s200
    %s222 = sphi 0, %s224
    %s225 = sphi 0, %s222
    %s226 = sphi 0, %s225
    %s242 = sphi 0, %s226
  $region4: #{relic_forward.1} parent=0 // loop_header_branch
    %17 = sbr.rel (%p15) target = $region8
  $region5: #{relic_forward.1} parent=0 // loop_body
    %s19 = ssub.s32 %s14, 1
    %s20 = ssub.s32 %s14, 2
    %s21 = sadd.s32 %s14, 1
    %s23 = sadd.s32 %s22, 1
    %p26 = scmp.eq.s32.totalorder %s14, 1
    %p27 = scmp.ne.s32.totalorder %s22, %s24
    %p28 = scmp.eq.s32.totalorder %s14, 0
    %p29 = por %p27, %p28
    %p30 = scmp.ne.s32.totalorder %s22, %s24
    %p31 = scmp.eq.s32.totalorder %s19, 1
    %p32 = por %p30, %p31
    %p33 = scmp.ne.s32.totalorder %s24, %s25
    %p34 = scmp.eq.s32.totalorder %s19, 0
    %p35 = por %p33, %p34
    %p36 = scmp.ne.s32.totalorder %s24, %s25
    %p37 = scmp.eq.s32.totalorder %s20, 1
    %p38 = por %p36, %p37
    %p40 = scmp.ne.s32.totalorder %s25, %s39
    %p41 = scmp.eq.s32.totalorder %s20, 0
    %p42 = por %p40, %p41
    %s44 = sadd.s32 %s43, 1
    %p47 = scmp.eq.s32.totalorder %s14, 1
    %p48 = scmp.ne.s32.totalorder %s43, %s45
    %p49 = scmp.eq.s32.totalorder %s14, 0
    %p50 = por %p48, %p49
    %p51 = scmp.ne.s32.totalorder %s43, %s45
    %p52 = scmp.eq.s32.totalorder %s19, 1
    %p53 = por %p51, %p52
    %p54 = scmp.ne.s32.totalorder %s45, %s46
    %p55 = scmp.eq.s32.totalorder %s19, 0
    %p56 = por %p54, %p55
    %p57 = scmp.ne.s32.totalorder %s45, %s46
    %p58 = scmp.eq.s32.totalorder %s20, 1
    %p59 = por %p57, %p58
    %p61 = scmp.ne.s32.totalorder %s46, %s60
    %p62 = scmp.eq.s32.totalorder %s20, 0
    %p63 = por %p61, %p62
    %s64 = ssub.s32 %s14, %s21
    %p65 = scmp.eq.s32.totalorder %s64, 0
    %s67 = sadd.s32 %s66, 1
    %s68 = scalar_select %p65, %s66, %s67
    %p71 = pneg %p65
    %p72 = scmp.eq.s32.totalorder %s14, 1
    %p73 = por %p71, %p72
    %p74 = scmp.ne.s32.totalorder %s66, %s69
    %p75 = scmp.eq.s32.totalorder %s14, 0
    %p76 = por %p74, %p75
    %p77 = scmp.ne.s32.totalorder %s66, %s69
    %p78 = scmp.eq.s32.totalorder %s19, 1
    %p79 = por %p77, %p78
    %p80 = scmp.ne.s32.totalorder %s69, %s70
    %p81 = scmp.eq.s32.totalorder %s19, 0
    %p82 = por %p80, %p81
    %p83 = scmp.ne.s32.totalorder %s69, %s70
    %p84 = scmp.eq.s32.totalorder %s20, 1
    %p85 = por %p83, %p84
    %p87 = scmp.ne.s32.totalorder %s70, %s86
    %p88 = scmp.eq.s32.totalorder %s20, 0
    %p89 = por %p87, %p88
    %s90 = ssub.s32 %s14, %s21
    %p91 = scmp.eq.s32.totalorder %s90, 0
    %s93 = sadd.s32 %s92, 1
    %s94 = scalar_select %p91, %s92, %s93
    %p97 = pneg %p91
    %p98 = scmp.eq.s32.totalorder %s14, 1
    %p99 = por %p97, %p98
    %p100 = scmp.ne.s32.totalorder %s92, %s95
    %p101 = scmp.eq.s32.totalorder %s14, 0
    %p102 = por %p100, %p101
    %p103 = scmp.ne.s32.totalorder %s92, %s95
    %p104 = scmp.eq.s32.totalorder %s19, 1
    %p105 = por %p103, %p104
    %p106 = scmp.ne.s32.totalorder %s95, %s96
    %p107 = scmp.eq.s32.totalorder %s19, 0
    %p108 = por %p106, %p107
    %p109 = scmp.ne.s32.totalorder %s95, %s96
    %p110 = scmp.eq.s32.totalorder %s20, 1
    %p111 = por %p109, %p110
    %p113 = scmp.ne.s32.totalorder %s96, %s112
    %p114 = scmp.eq.s32.totalorder %s20, 0
    %p115 = por %p113, %p114
    %s116 = ssub.s32 %s14, %s21
    %p117 = scmp.eq.s32.totalorder %s116, 0
    %s119 = sadd.s32 %s118, 1
    %s120 = scalar_select %p117, %s118, %s119
    %p123 = pneg %p117
    %p124 = scmp.eq.s32.totalorder %s14, 1
    %p125 = por %p123, %p124
    %p126 = scmp.ne.s32.totalorder %s118, %s121
    %p127 = scmp.eq.s32.totalorder %s14, 0
    %p128 = por %p126, %p127
    %p129 = scmp.ne.s32.totalorder %s118, %s121
    %p130 = scmp.eq.s32.totalorder %s19, 1
    %p131 = por %p129, %p130
    %p132 = scmp.ne.s32.totalorder %s121, %s122
    %p133 = scmp.eq.s32.totalorder %s19, 0
    %p134 = por %p132, %p133
    %p135 = scmp.ne.s32.totalorder %s121, %s122
    %p136 = scmp.eq.s32.totalorder %s20, 1
    %p137 = por %p135, %p136
    %p139 = scmp.ne.s32.totalorder %s122, %s138
    %p140 = scmp.eq.s32.totalorder %s20, 0
    %p141 = por %p139, %p140
    %s142 = ssub.s32 %s14, %s21
    %p143 = scmp.eq.s32.totalorder %s142, 0
    %s145 = sadd.s32 %s144, 1
    %s146 = scalar_select %p143, %s144, %s145
    %p149 = pneg %p143
    %p150 = scmp.eq.s32.totalorder %s14, 1
    %p151 = por %p149, %p150
    %p152 = scmp.ne.s32.totalorder %s144, %s147
    %p153 = scmp.eq.s32.totalorder %s14, 0
    %p154 = por %p152, %p153
    %p155 = scmp.ne.s32.totalorder %s144, %s147
    %p156 = scmp.eq.s32.totalorder %s19, 1
    %p157 = por %p155, %p156
    %p158 = scmp.ne.s32.totalorder %s147, %s148
    %p159 = scmp.eq.s32.totalorder %s19, 0
    %p160 = por %p158, %p159
    %p161 = scmp.ne.s32.totalorder %s147, %s148
    %p162 = scmp.eq.s32.totalorder %s20, 1
    %p163 = por %p161, %p162
    %p165 = scmp.ne.s32.totalorder %s148, %s164
    %p166 = scmp.eq.s32.totalorder %s20, 0
    %p167 = por %p165, %p166
    %s168 = ssub.s32 %s14, %s21
    %p169 = scmp.eq.s32.totalorder %s168, 0
    %s171 = sadd.s32 %s170, 1
    %s172 = scalar_select %p169, %s170, %s171
    %p175 = pneg %p169
    %p176 = scmp.eq.s32.totalorder %s14, 1
    %p177 = por %p175, %p176
    %p178 = scmp.ne.s32.totalorder %s170, %s173
    %p179 = scmp.eq.s32.totalorder %s14, 0
    %p180 = por %p178, %p179
    %p181 = scmp.ne.s32.totalorder %s170, %s173
    %p182 = scmp.eq.s32.totalorder %s19, 1
    %p183 = por %p181, %p182
    %p184 = scmp.ne.s32.totalorder %s173, %s174
    %p185 = scmp.eq.s32.totalorder %s19, 0
    %p186 = por %p184, %p185
    %p187 = scmp.ne.s32.totalorder %s173, %s174
    %p188 = scmp.eq.s32.totalorder %s20, 1
    %p189 = por %p187, %p188
    %p191 = scmp.ne.s32.totalorder %s174, %s190
    %p192 = scmp.eq.s32.totalorder %s20, 0
    %p193 = por %p191, %p192
    %s194 = ssub.s32 %s14, %s21
    %p195 = scmp.eq.s32.totalorder %s194, 0
    %s197 = sadd.s32 %s196, 1
    %s198 = scalar_select %p195, %s196, %s197
    %p201 = pneg %p195
    %p202 = scmp.eq.s32.totalorder %s14, 1
    %p203 = por %p201, %p202
    %p204 = scmp.ne.s32.totalorder %s196, %s199
    %p205 = scmp.eq.s32.totalorder %s14, 0
    %p206 = por %p204, %p205
    %p207 = scmp.ne.s32.totalorder %s196, %s199
    %p208 = scmp.eq.s32.totalorder %s19, 1
    %p209 = por %p207, %p208
    %p210 = scmp.ne.s32.totalorder %s199, %s200
    %p211 = scmp.eq.s32.totalorder %s19, 0
    %p212 = por %p210, %p211
    %p213 = scmp.ne.s32.totalorder %s199, %s200
    %p214 = scmp.eq.s32.totalorder %s20, 1
    %p215 = por %p213, %p214
    %p217 = scmp.ne.s32.totalorder %s200, %s216
    %p218 = scmp.eq.s32.totalorder %s20, 0
    %p219 = por %p217, %p218
    %s220 = ssub.s32 %s14, %s21
    %p221 = scmp.eq.s32.totalorder %s220, 0
    %s223 = sadd.s32 %s222, 1
    %s224 = scalar_select %p221, %s222, %s223
    %p227 = pneg %p221
    %p228 = scmp.eq.s32.totalorder %s14, 1
    %p229 = por %p227, %p228
    %p230 = scmp.ne.s32.totalorder %s222, %s225
    %p231 = scmp.eq.s32.totalorder %s14, 0
    %p232 = por %p230, %p231
    %p233 = scmp.ne.s32.totalorder %s222, %s225
    %p234 = scmp.eq.s32.totalorder %s19, 1
    %p235 = por %p233, %p234
    %p236 = scmp.ne.s32.totalorder %s225, %s226
    %p237 = scmp.eq.s32.totalorder %s19, 0
    %p238 = por %p236, %p237
    %p239 = scmp.ne.s32.totalorder %s225, %s226
    %p240 = scmp.eq.s32.totalorder %s20, 1
    %p241 = por %p239, %p240
    %p243 = scmp.ne.s32.totalorder %s226, %s242
    %p244 = scmp.eq.s32.totalorder %s20, 0
    %p245 = por %p243, %p244
    %p246 = scmp.le.s32.totalorder 1, %s14
    %p247 = scmp.lt.s32.totalorder %s14, 3
    %p248 = pnand %p246, %p247
    %p249 = pneg %p248
    // Predicated region
    $region9: #{relic_forward.1} parent=5 // pred_check
      _
    $region10: #{relic_forward.1} parent=5 // pred_check_branch
      %251 = sbr.rel (%p248) target = $region12
    $region11: #{relic_forward.1} parent=5 // pred_region
      %s252 = ssub.s32 %s14, 1
      // Predicated region
      $region13: #{relic_forward.1} parent=11 // pred_check
        %p253 = pneg %p35
      $region14: #{relic_forward.1} parent=11 // pred_check_branch
        %255 = sbr.rel (%p253) target = $region16
      $region15: #{relic_forward.1} parent=11 // pred_region
        _
      $region16: #{relic_forward.1} parent=11 // pred_fallthru
        _
      // Predicated region
      $region17: #{relic_forward.1} parent=11 // pred_check
        %p256 = pneg %p56
      $region18: #{relic_forward.1} parent=11 // pred_check_branch
        %258 = sbr.rel (%p256) target = $region20
      $region19: #{relic_forward.1} parent=11 // pred_region
        _
      $region20: #{relic_forward.1} parent=11 // pred_fallthru
        _
    $region12: #{relic_forward.1} parent=5 // pred_fallthru
      _
    %p259 = scmp.lt.s32.totalorder %s14, 2
    // Predicated region
    $region21: #{relic_forward.1} parent=5 // pred_check
      %p260 = pneg %p259
    $region22: #{relic_forward.1} parent=5 // pred_check_branch
      %262 = sbr.rel (%p260) target = $region24
    $region23: #{relic_forward.1} parent=5 // pred_region
      // Predicated region
      $region25: #{relic_forward.1} parent=23 // pred_check
        %p263 = pneg %p76
      $region26: #{relic_forward.1} parent=23 // pred_check_branch
        %265 = sbr.rel (%p263) target = $region28
      $region27: #{relic_forward.1} parent=23 // pred_region
        %p266 = scmp.lt.s32.totalorder %s14, 1
        %s267 = scalar_select %p266, %s14, 1
        %s268 = smul.addr %s267, 16
        %s269 = smul.addr %s268, 8
        %s270 = scalar_lea.vmem %s2, %s269
      $region28: #{relic_forward.1} parent=23 // pred_fallthru
        _
      // Predicated region
      $region29: #{relic_forward.1} parent=23 // pred_check
        %p271 = pneg %p102
      $region30: #{relic_forward.1} parent=23 // pred_check_branch
        %273 = sbr.rel (%p271) target = $region32
      $region31: #{relic_forward.1} parent=23 // pred_region
        %p274 = scmp.lt.s32.totalorder %s14, 1
        %s275 = scalar_select %p274, %s14, 1
        %s276 = scalar_lea.vmem %s3, %s275
      $region32: #{relic_forward.1} parent=23 // pred_fallthru
        _
      // Predicated region
      $region33: #{relic_forward.1} parent=23 // pred_check
        %p277 = pneg %p128
      $region34: #{relic_forward.1} parent=23 // pred_check_branch
        %279 = sbr.rel (%p277) target = $region36
      $region35: #{relic_forward.1} parent=23 // pred_region
        %p280 = scmp.lt.s32.totalorder %s14, 1
        %s281 = scalar_select %p280, %s14, 1
        %s282 = smul.addr %s281, 16
        %s283 = smul.addr %s282, 8
        %s284 = scalar_lea.vmem %s4, %s283
      $region36: #{relic_forward.1} parent=23 // pred_fallthru
        _
      // Predicated region
      $region37: #{relic_forward.1} parent=23 // pred_check
        %p285 = pneg %p154
      $region38: #{relic_forward.1} parent=23 // pred_check_branch
        %287 = sbr.rel (%p285) target = $region40
      $region39: #{relic_forward.1} parent=23 // pred_region
        %p288 = scmp.lt.s32.totalorder %s14, 1
        %s289 = scalar_select %p288, %s14, 1
        %s290 = smul.addr %s289, 4
        %s291 = scalar_lea.vmem %s5, %s290
      $region40: #{relic_forward.1} parent=23 // pred_fallthru
        _
      // Predicated region
      $region41: #{relic_forward.1} parent=23 // pred_check
        %p292 = pneg %p180
      $region42: #{relic_forward.1} parent=23 // pred_check_branch
        %294 = sbr.rel (%p292) target = $region44
      $region43: #{relic_forward.1} parent=23 // pred_region
        %p295 = scmp.lt.s32.totalorder %s14, 1
        %s296 = scalar_select %p295, %s14, 1
        %s297 = smul.addr %s296, 4
        %s298 = scalar_lea.vmem %s6, %s297
      $region44: #{relic_forward.1} parent=23 // pred_fallthru
        _
      // Predicated region
      $region45: #{relic_forward.1} parent=23 // pred_check
        %p299 = pneg %p206
      $region46: #{relic_forward.1} parent=23 // pred_check_branch
        %301 = sbr.rel (%p299) target = $region48
      $region47: #{relic_forward.1} parent=23 // pred_region
        %p302 = scmp.lt.s32.totalorder %s14, 1
        %s303 = scalar_select %p302, %s14, 1
        %s304 = smul.addr %s303, 64
        %s305 = smul.addr %s304, 8
        %s306 = scalar_lea.vmem %s7, %s305
      $region48: #{relic_forward.1} parent=23 // pred_fallthru
        _
    $region24: #{relic_forward.1} parent=5 // pred_fallthru
      _
    %p307 = scmp.le.s32.totalorder 1, %s14
    %p308 = scmp.lt.s32.totalorder %s14, 3
    %p309 = pnand %p307, %p308
    %p310 = pneg %p309
    // Predicated region
    $region49: #{relic_forward.1} parent=5 // pred_check
      _
    $region50: #{relic_forward.1} parent=5 // pred_check_branch
      %312 = sbr.rel (%p309) target = $region52
    $region51: #{relic_forward.1} parent=5 // pred_region
      %s313 = ssub.s32 %s14, 1
      %p314 = pneg %p35
      %p315 = pneg %p32
      %p316 = pneg %p56
      %p317 = pneg %p53
      %p318 = scmp.lt.s32.totalorder %s19, 1
      %s319 = scalar_select %p318, %s19, 1
      %s320 = smul.addr %s319, 16
      %s321 = smul.addr %s320, 8
      %s322 = scalar_lea.vmem %s2, %s321
      %p323 = pneg %p82
      %p324 = pneg %p79
      %p325 = scmp.lt.s32.totalorder %s19, 1
      %s326 = scalar_select %p325, %s19, 1
      %s327 = scalar_lea.vmem %s3, %s326
      %p328 = pneg %p108
      %p329 = pneg %p105
      %p330 = scmp.lt.s32.totalorder %s19, 1
      %s331 = scalar_select %p330, %s19, 1
      %s332 = smul.addr %s331, 16
      %s333 = smul.addr %s332, 8
      %s334 = scalar_lea.vmem %s4, %s333
      %p335 = pneg %p134
      %p336 = pneg %p131
      %p337 = scmp.lt.s32.totalorder %s19, 1
      %s338 = scalar_select %p337, %s19, 1
      %s339 = smul.addr %s338, 4
      %s340 = scalar_lea.vmem %s5, %s339
      %p341 = pneg %p160
      %p342 = pneg %p157
      %p343 = scmp.lt.s32.totalorder %s19, 1
      %s344 = scalar_select %p343, %s19, 1
      %s345 = smul.addr %s344, 4
      %s346 = scalar_lea.vmem %s6, %s345
      %p347 = pneg %p186
      %p348 = pneg %p183
      %p349 = scmp.lt.s32.totalorder %s19, 1
      %s350 = scalar_select %p349, %s19, 1
      %s351 = smul.addr %s350, 64
      %s352 = smul.addr %s351, 8
      %s353 = scalar_lea.vmem %s7, %s352
      %p354 = pneg %p212
      %p355 = pneg %p209
      %p356 = pneg %p238
      %p357 = pneg %p235
      %p358 = scmp.lt.s32.totalorder %s19, 1
      %s359 = scalar_select %p358, %s19, 1
      %s360 = smul.addr %s359, 4
      %s361 = scalar_lea.vmem %s8, %s360
      %p362 = scmp.lt.s32.totalorder %s19, 1
      %s363 = scalar_select %p362, %s19, 1
      %s364 = smul.addr %s363, 16
      %s365 = smul.addr %s364, 8
      %s366 = scalar_lea.vmem %s2, %s365
      %p367 = scmp.lt.s32.totalorder %s19, 1
      %s368 = scalar_select %p367, %s19, 1
      %s369 = scalar_lea.vmem %s3, %s368
      %p370 = scmp.lt.s32.totalorder %s19, 1
      %s371 = scalar_select %p370, %s19, 1
      %s372 = smul.addr %s371, 16
      %s373 = smul.addr %s372, 8
      %s374 = scalar_lea.vmem %s4, %s373
      %p375 = scmp.lt.s32.totalorder %s19, 1
      %s376 = scalar_select %p375, %s19, 1
      %s377 = smul.addr %s376, 4
      %s378 = scalar_lea.vmem %s5, %s377
      %p379 = scmp.lt.s32.totalorder %s19, 1
      %s380 = scalar_select %p379, %s19, 1
      %s381 = smul.addr %s380, 4
      %s382 = scalar_lea.vmem %s6, %s381
      %p383 = scmp.lt.s32.totalorder %s19, 1
      %s384 = scalar_select %p383, %s19, 1
      %s385 = smul.addr %s384, 64
      %s386 = smul.addr %s385, 8
      %s387 = scalar_lea.vmem %s7, %s386
      %p388 = scmp.lt.s32.totalorder %s19, 1
      %s389 = scalar_select %p388, %s19, 1
      %s390 = smul.addr %s389, 4
      %s391 = scalar_lea.vmem %s8, %s390
      %v392 = vld [vmem:[%s0] sm:$0xff]
      %v393 = vld [vmem:[%s0 + $0x8] sm:$0xff]
      %v394 = vld [vmem:[%s0 + $0x10] sm:$0xff]
      %v395 = vld [vmem:[%s0 + $0x18] sm:$0xff]
      %v396 = vld [vmem:[%s0 + $0x20] sm:$0xff]
      %v397 = vld [vmem:[%s0 + $0x28] sm:$0xff]
      %v398 = vld [vmem:[%s0 + $0x30] sm:$0xff]
      %v399 = vld [vmem:[%s0 + $0x38] sm:$0xff]
      %v400 = vld [vmem:[%s0 + $0x40] sm:$0xff]
      %v401 = vld [vmem:[%s0 + $0x48] sm:$0xff]
      %v402 = vld [vmem:[%s0 + $0x50] sm:$0xff]
      %v403 = vld [vmem:[%s0 + $0x58] sm:$0xff]
      %v404 = vld [vmem:[%s0 + $0x60] sm:$0xff]
      %v405 = vld [vmem:[%s0 + $0x68] sm:$0xff]
      %v406 = vld [vmem:[%s0 + $0x70] sm:$0xff]
      %v407 = vld [vmem:[%s0 + $0x78] sm:$0xff]
      %v408 = vld [vmem:[%s0 + $0x80] sm:$0xff]
      %v409 = vld [vmem:[%s0 + $0x88] sm:$0xff]
      %v410 = vld [vmem:[%s0 + $0x90] sm:$0xff]
      %v411 = vld [vmem:[%s0 + $0x98] sm:$0xff]
      %v412 = vld [vmem:[%s0 + $0xa0] sm:$0xff]
      %v413 = vld [vmem:[%s0 + $0xa8] sm:$0xff]
      %v414 = vld [vmem:[%s0 + $0xb0] sm:$0xff]
      %v415 = vld [vmem:[%s0 + $0xb8] sm:$0xff]
      %v416 = vld [vmem:[%s0 + $0xc0] sm:$0xff]
      %v417 = vld [vmem:[%s0 + $0xc8] sm:$0xff]
      %v418 = vld [vmem:[%s0 + $0xd0] sm:$0xff]
      %v419 = vld [vmem:[%s0 + $0xd8] sm:$0xff]
      %v420 = vld [vmem:[%s0 + $0xe0] sm:$0xff]
      %v421 = vld [vmem:[%s0 + $0xe8] sm:$0xff]
      %v422 = vld [vmem:[%s0 + $0xf0] sm:$0xff]
      %v423 = vld [vmem:[%s0 + $0xf8] sm:$0xff]
      %v424 = vld [vmem:[%s0 + $0x100] sm:$0xff]
      %v425 = vld [vmem:[%s0 + $0x108] sm:$0xff]
      %v426 = vld [vmem:[%s0 + $0x110] sm:$0xff]
      %v427 = vld [vmem:[%s0 + $0x118] sm:$0xff]
      %v428 = vld [vmem:[%s0 + $0x120] sm:$0xff]
      %v429 = vld [vmem:[%s0 + $0x128] sm:$0xff]
      %v430 = vld [vmem:[%s0 + $0x130] sm:$0xff]
      %v431 = vld [vmem:[%s0 + $0x138] sm:$0xff]
      %v432 = vld [vmem:[%s0 + $0x140] sm:$0xff]
      %v433 = vld [vmem:[%s0 + $0x148] sm:$0xff]
      %v434 = vld [vmem:[%s0 + $0x150] sm:$0xff]
      %v435 = vld [vmem:[%s0 + $0x158] sm:$0xff]
      %v436 = vld [vmem:[%s0 + $0x160] sm:$0xff]
      %v437 = vld [vmem:[%s0 + $0x168] sm:$0xff]
      %v438 = vld [vmem:[%s0 + $0x170] sm:$0xff]
      %v439 = vld [vmem:[%s0 + $0x178] sm:$0xff]
      %v440 = vld [vmem:[%s0 + $0x180] sm:$0xff]
      %v441 = vld [vmem:[%s0 + $0x188] sm:$0xff]
      %v442 = vld [vmem:[%s0 + $0x190] sm:$0xff]
      %v443 = vld [vmem:[%s0 + $0x198] sm:$0xff]
      %v444 = vld [vmem:[%s0 + $0x1a0] sm:$0xff]
      %v445 = vld [vmem:[%s0 + $0x1a8] sm:$0xff]
      %v446 = vld [vmem:[%s0 + $0x1b0] sm:$0xff]
      %v447 = vld [vmem:[%s0 + $0x1b8] sm:$0xff]
      %v448 = vld [vmem:[%s0 + $0x1c0] sm:$0xff]
      %v449 = vld [vmem:[%s0 + $0x1c8] sm:$0xff]
      %v450 = vld [vmem:[%s0 + $0x1d0] sm:$0xff]
      %v451 = vld [vmem:[%s0 + $0x1d8] sm:$0xff]
      %v452 = vld [vmem:[%s0 + $0x1e0] sm:$0xff]
      %v453 = vld [vmem:[%s0 + $0x1e8] sm:$0xff]
      %v454 = vld [vmem:[%s0 + $0x1f0] sm:$0xff]
      %v455 = vld [vmem:[%s0 + $0x1f8] sm:$0xff]
      %v456 = vld [vmem:[%s0 + $0x200] sm:$0xff]
      %v457 = vld [vmem:[%s0 + $0x208] sm:$0xff]
      %v458 = vld [vmem:[%s0 + $0x210] sm:$0xff]
      %v459 = vld [vmem:[%s0 + $0x218] sm:$0xff]
      %v460 = vld [vmem:[%s0 + $0x220] sm:$0xff]
      %v461 = vld [vmem:[%s0 + $0x228] sm:$0xff]
      %v462 = vld [vmem:[%s0 + $0x230] sm:$0xff]
      %v463 = vld [vmem:[%s0 + $0x238] sm:$0xff]
      %v464 = vld [vmem:[%s0 + $0x240] sm:$0xff]
      %v465 = vld [vmem:[%s0 + $0x248] sm:$0xff]
      %v466 = vld [vmem:[%s0 + $0x250] sm:$0xff]
      %v467 = vld [vmem:[%s0 + $0x258] sm:$0xff]
      %v468 = vld [vmem:[%s0 + $0x260] sm:$0xff]
      %v469 = vld [vmem:[%s0 + $0x268] sm:$0xff]
      %v470 = vld [vmem:[%s0 + $0x270] sm:$0xff]
      %v471 = vld [vmem:[%s0 + $0x278] sm:$0xff]
      %v472 = vld [vmem:[%s0 + $0x280] sm:$0xff]
      %v473 = vld [vmem:[%s0 + $0x288] sm:$0xff]
      %v474 = vld [vmem:[%s0 + $0x290] sm:$0xff]
      %v475 = vld [vmem:[%s0 + $0x298] sm:$0xff]
      %v476 = vld [vmem:[%s0 + $0x2a0] sm:$0xff]
      %v477 = vld [vmem:[%s0 + $0x2a8] sm:$0xff]
      %v478 = vld [vmem:[%s0 + $0x2b0] sm:$0xff]
      %v479 = vld [vmem:[%s0 + $0x2b8] sm:$0xff]
      %v480 = vld [vmem:[%s0 + $0x2c0] sm:$0xff]
      %v481 = vld [vmem:[%s0 + $0x2c8] sm:$0xff]
      %v482 = vld [vmem:[%s0 + $0x2d0] sm:$0xff]
      %v483 = vld [vmem:[%s0 + $0x2d8] sm:$0xff]
      %v484 = vld [vmem:[%s0 + $0x2e0] sm:$0xff]
      %v485 = vld [vmem:[%s0 + $0x2e8] sm:$0xff]
      %v486 = vld [vmem:[%s0 + $0x2f0] sm:$0xff]
      %v487 = vld [vmem:[%s0 + $0x2f8] sm:$0xff]
      %v488 = vld [vmem:[%s0 + $0x300] sm:$0xff]
      %v489 = vld [vmem:[%s0 + $0x308] sm:$0xff]
      %v490 = vld [vmem:[%s0 + $0x310] sm:$0xff]
      %v491 = vld [vmem:[%s0 + $0x318] sm:$0xff]
      %v492 = vld [vmem:[%s0 + $0x320] sm:$0xff]
      %v493 = vld [vmem:[%s0 + $0x328] sm:$0xff]
      %v494 = vld [vmem:[%s0 + $0x330] sm:$0xff]
      %v495 = vld [vmem:[%s0 + $0x338] sm:$0xff]
      %v496 = vld [vmem:[%s0 + $0x340] sm:$0xff]
      %v497 = vld [vmem:[%s0 + $0x348] sm:$0xff]
      %v498 = vld [vmem:[%s0 + $0x350] sm:$0xff]
      %v499 = vld [vmem:[%s0 + $0x358] sm:$0xff]
      %v500 = vld [vmem:[%s0 + $0x360] sm:$0xff]
      %v501 = vld [vmem:[%s0 + $0x368] sm:$0xff]
      %v502 = vld [vmem:[%s0 + $0x370] sm:$0xff]
      %v503 = vld [vmem:[%s0 + $0x378] sm:$0xff]
      %v504 = vld [vmem:[%s0 + $0x380] sm:$0xff]
      %v505 = vld [vmem:[%s0 + $0x388] sm:$0xff]
      %v506 = vld [vmem:[%s0 + $0x390] sm:$0xff]
      %v507 = vld [vmem:[%s0 + $0x398] sm:$0xff]
      %v508 = vld [vmem:[%s0 + $0x3a0] sm:$0xff]
      %v509 = vld [vmem:[%s0 + $0x3a8] sm:$0xff]
      %v510 = vld [vmem:[%s0 + $0x3b0] sm:$0xff]
      %v511 = vld [vmem:[%s0 + $0x3b8] sm:$0xff]
      %v512 = vld [vmem:[%s0 + $0x3c0] sm:$0xff]
      %v513 = vld [vmem:[%s0 + $0x3c8] sm:$0xff]
      %v514 = vld [vmem:[%s0 + $0x3d0] sm:$0xff]
      %v515 = vld [vmem:[%s0 + $0x3d8] sm:$0xff]
      %v516 = vld [vmem:[%s0 + $0x3e0] sm:$0xff]
      %v517 = vld [vmem:[%s0 + $0x3e8] sm:$0xff]
      %v518 = vld [vmem:[%s0 + $0x3f0] sm:$0xff]
      %v519 = vld [vmem:[%s0 + $0x3f8] sm:$0xff]
      %v520 = vld [vmem:[%s366] sm:$0xff]
      %v521 = vld [vmem:[%s366 + $0x8] sm:$0xff]
      %v522 = vld [vmem:[%s366 + $0x10] sm:$0xff]
      %v523 = vld [vmem:[%s366 + $0x18] sm:$0xff]
      %v524 = vld [vmem:[%s366 + $0x20] sm:$0xff]
      %v525 = vld [vmem:[%s366 + $0x28] sm:$0xff]
      %v526 = vld [vmem:[%s366 + $0x30] sm:$0xff]
      %v527 = vld [vmem:[%s366 + $0x38] sm:$0xff]
      %v528 = vld [vmem:[%s366 + $0x40] sm:$0xff]
      %v529 = vld [vmem:[%s366 + $0x48] sm:$0xff]
      %v530 = vld [vmem:[%s366 + $0x50] sm:$0xff]
      %v531 = vld [vmem:[%s366 + $0x58] sm:$0xff]
      %v532 = vld [vmem:[%s366 + $0x60] sm:$0xff]
      %v533 = vld [vmem:[%s366 + $0x68] sm:$0xff]
      %v534 = vld [vmem:[%s366 + $0x70] sm:$0xff]
      %v535 = vld [vmem:[%s366 + $0x78] sm:$0xff]
      %v536 = vld [vmem:[%s369] sm:$0x1]
      %v538 = vlaneseq
      %v539 = vshrl.u32 %v538, 7
      %v540 = vsub.s32 0, %v539
      %v541 = vrot.slane %v536, %v540
      %543 = vmatprep.subr.mxu0 0.0
      %544 = vmatpush1.msra.mxu0 %v520
      %545 = vmatprep.subr.mxu0 0.0
      %546 = vmatpush1.msra.mxu0 %v521
      %547 = vmatprep.subr.mxu0 0.0
      %548 = vmatpush1.msra.mxu0 %v522
      %549 = vmatprep.subr.mxu0 0.0
      %550 = vmatpush1.msra.mxu0 %v523
      %551 = vmatprep.subr.mxu0 0.0
      %552 = vmatpush1.msra.mxu0 %v524
      %553 = vmatprep.subr.mxu0 0.0
      %554 = vmatpush1.msra.mxu0 %v525
      %555 = vmatprep.subr.mxu0 0.0
      %556 = vmatpush1.msra.mxu0 %v526
      %557 = vmatprep.subr.mxu0 0.0
      %558 = vmatpush1.msra.mxu0 %v527
      %559 = vmatprep.subr.mxu0 0.0
      %560 = vmatpush1.msra.mxu0 %v528
      %561 = vmatprep.subr.mxu0 0.0
      %562 = vmatpush1.msra.mxu0 %v529
      %563 = vmatprep.subr.mxu0 0.0
      %564 = vmatpush1.msra.mxu0 %v530
      %565 = vmatprep.subr.mxu0 0.0
      %566 = vmatpush1.msra.mxu0 %v531
      %567 = vmatprep.subr.mxu0 0.0
      %568 = vmatpush1.msra.mxu0 %v532
      %569 = vmatprep.subr.mxu0 0.0
      %570 = vmatpush1.msra.mxu0 %v533
      %571 = vmatprep.subr.mxu0 0.0
      %572 = vmatpush1.msra.mxu0 %v534
      %573 = vmatprep.subr.mxu0 0.0
      %574 = vmatpush1.msra.mxu0 %v535
      %575 = vmatprep.subr.mxu0 0.0
      %576 = vmatpush1.msra.mxu0 0.0
      %577 = vmatprep.subr.mxu0 0.0
      %578 = vmatpush1.msra.mxu0 0.0
      %579 = vmatprep.subr.mxu0 0.0
      %580 = vmatpush1.msra.mxu0 0.0
      %581 = vmatprep.subr.mxu0 0.0
      %582 = vmatpush1.msra.mxu0 0.0
      %583 = vmatprep.subr.mxu0 0.0
      %584 = vmatpush1.msra.mxu0 0.0
      %585 = vmatprep.subr.mxu0 0.0
      %586 = vmatpush1.msra.mxu0 0.0
      %587 = vmatprep.subr.mxu0 0.0
      %588 = vmatpush1.msra.mxu0 0.0
      %589 = vmatprep.subr.mxu0 0.0
      %590 = vmatpush1.msra.mxu0 0.0
      %591 = vmatprep.subr.mxu0 0.0
      %592 = vmatpush1.msra.mxu0 0.0
      %593 = vmatprep.subr.mxu0 0.0
      %594 = vmatpush1.msra.mxu0 0.0
      %595 = vmatprep.subr.mxu0 0.0
      %596 = vmatpush1.msra.mxu0 0.0
      %597 = vmatprep.subr.mxu0 0.0
      %598 = vmatpush1.msra.mxu0 0.0
      %599 = vmatprep.subr.mxu0 0.0
      %600 = vmatpush1.msra.mxu0 0.0
      %601 = vmatprep.subr.mxu0 0.0
      %602 = vmatpush1.msra.mxu0 0.0
      %603 = vmatprep.subr.mxu0 0.0
      %604 = vmatpush1.msra.mxu0 0.0
      %605 = vmatprep.subr.mxu0 0.0
      %606 = vmatpush1.msra.mxu0 0.0
      %607 = vmatprep.mubr.f32.mxu0 0.0
      %608 = vmatmul.mubr.f32.gmra.mrb[0].mxu0 %v392
      %v609 = vpop.f32.mrb[0].mxu0
      %v610 = vadd.f32 %v541, %v609
      %v611 = vpop.f32.mrb[0].mxu0
      %612 = vmatprep.mubr.f32.mxu0 0.0
      %613 = vmatmul.mubr.f32.gmra.mrb[0].mxu0 %v393
      %v614 = vpop.f32.mrb[0].mxu0
      %v615 = vadd.f32 %v541, %v614
      %v616 = vpop.f32.mrb[0].mxu0
      %617 = vmatprep.mubr.f32.mxu0 0.0
      %618 = vmatmul.mubr.f32.gmra.mrb[0].mxu0 %v394
      %v619 = vpop.f32.mrb[0].mxu0
      %v620 = vadd.f32 %v541, %v619
      %v621 = vpop.f32.mrb[0].mxu0
      %622 = vmatprep.mubr.f32.mxu0 0.0
      %623 = vmatmul.mubr.f32.gmra.mrb[0].mxu0 %v395
      %v624 = vpop.f32.mrb[0].mxu0
      %v625 = vadd.f32 %v541, %v624
      %v626 = vpop.f32.mrb[0].mxu0
      %627 = vmatprep.mubr.f32.mxu0 0.0
      %628 = vmatmul.mubr.f32.gmra.mrb[0].mxu0 %v396
      %v629 = vpop.f32.mrb[0].mxu0
      %v630 = vadd.f32 %v541, %v629
      %v631 = vpop.f32.mrb[0].mxu0
      %632 = vmatprep.mubr.f32.mxu0 0.0
      %633 = vmatmul.mubr.f32.gmra.mrb[0].mxu0 %v397
      %v634 = vpop.f32.mrb[0].mxu0
      %v635 = vadd.f32 %v541, %v634
      %v636 = vpop.f32.mrb[0].mxu0
      %637 = vmatprep.mubr.f32.mxu0 0.0
      %638 = vmatmul.mubr.f32.gmra.mrb[0].mxu0 %v398
      %v639 = vpop.f32.mrb[0].mxu0
      %v640 = vadd.f32 %v541, %v639
      %v641 = vpop.f32.mrb[0].mxu0
      %642 = vmatprep.mubr.f32.mxu0 0.0
      %643 = vmatmul.mubr.f32.gmra.mrb[0].mxu0 %v399
      %v644 = vpop.f32.mrb[0].mxu0
      %v645 = vadd.f32 %v541, %v644
      %v646 = vpop.f32.mrb[0].mxu0
      %647 = vmatprep.mubr.f32.mxu0 0.0
      %648 = vmatmul.mubr.f32.gmra.mrb[0].mxu0 %v400
      %v649 = vpop.f32.mrb[0].mxu0
      %v650 = vadd.f32 %v541, %v649
      %v651 = vpop.f32.mrb[0].mxu0
      %652 = vmatprep.mubr.f32.mxu0 0.0
      %653 = vmatmul.mubr.f32.gmra.mrb[0].mxu0 %v401
      %v654 = vpop.f32.mrb[0].mxu0
      %v655 = vadd.f32 %v541, %v654
      %v656 = vpop.f32.mrb[0].mxu0
      %657 = vmatprep.mubr.f32.mxu0 0.0
      %658 = vmatmul.mubr.f32.gmra.mrb[0].mxu0 %v402
      %v659 = vpop.f32.mrb[0].mxu0
      %v660 = vadd.f32 %v541, %v659
      %v661 = vpop.f32.mrb[0].mxu0
      %662 = vmatprep.mubr.f32.mxu0 0.0
      %663 = vmatmul.mubr.f32.gmra.mrb[0].mxu0 %v403
      %v664 = vpop.f32.mrb[0].mxu0
      %v665 = vadd.f32 %v541, %v664
      %v666 = vpop.f32.mrb[0].mxu0
      %667 = vmatprep.mubr.f32.mxu0 0.0
      %668 = vmatmul.mubr.f32.gmra.mrb[0].mxu0 %v404
      %v669 = vpop.f32.mrb[0].mxu0
      %v670 = vadd.f32 %v541, %v669
      %v671 = vpop.f32.mrb[0].mxu0
      %672 = vmatprep.mubr.f32.mxu0 0.0
      %673 = vmatmul.mubr.f32.gmra.mrb[0].mxu0 %v405
      %v674 = vpop.f32.mrb[0].mxu0
      %v675 = vadd.f32 %v541, %v674
      %v676 = vpop.f32.mrb[0].mxu0
      %677 = vmatprep.mubr.f32.mxu0 0.0
      %678 = vmatmul.mubr.f32.gmra.mrb[0].mxu0 %v406
      %v679 = vpop.f32.mrb[0].mxu0
      %v680 = vadd.f32 %v541, %v679
      %v681 = vpop.f32.mrb[0].mxu0
      %682 = vmatprep.mubr.f32.mxu0 0.0
      %683 = vmatmul.mubr.f32.gmra.mrb[0].mxu0 %v407
      %v684 = vpop.f32.mrb[0].mxu0
      %v685 = vadd.f32 %v541, %v684
      %v686 = vpop.f32.mrb[0].mxu0
      %687 = vmatprep.mubr.f32.mxu0 0.0
      %688 = vmatmul.mubr.f32.gmra.mrb[0].mxu0 %v408
      %v689 = vpop.f32.mrb[0].mxu0
      %v690 = vadd.f32 %v541, %v689
      %v691 = vpop.f32.mrb[0].mxu0
      %692 = vmatprep.mubr.f32.mxu0 0.0
      %693 = vmatmul.mubr.f32.gmra.mrb[0].mxu0 %v409
      %v694 = vpop.f32.mrb[0].mxu0
      %v695 = vadd.f32 %v541, %v694
      %v696 = vpop.f32.mrb[0].mxu0
      %697 = vmatprep.mubr.f32.mxu0 0.0
      %698 = vmatmul.mubr.f32.gmra.mrb[0].mxu0 %v410
      %v699 = vpop.f32.mrb[0].mxu0
      %v700 = vadd.f32 %v541, %v699
      %v701 = vpop.f32.mrb[0].mxu0
      %702 = vmatprep.mubr.f32.mxu0 0.0
      %703 = vmatmul.mubr.f32.gmra.mrb[0].mxu0 %v411
      %v704 = vpop.f32.mrb[0].mxu0
      %v705 = vadd.f32 %v541, %v704
      %v706 = vpop.f32.mrb[0].mxu0
      %707 = vmatprep.mubr.f32.mxu0 0.0
      %708 = vmatmul.mubr.f32.gmra.mrb[0].mxu0 %v412
      %v709 = vpop.f32.mrb[0].mxu0
      %v710 = vadd.f32 %v541, %v709
      %v711 = vpop.f32.mrb[0].mxu0
      %712 = vmatprep.mubr.f32.mxu0 0.0
      %713 = vmatmul.mubr.f32.gmra.mrb[0].mxu0 %v413
      %v714 = vpop.f32.mrb[0].mxu0
      %v715 = vadd.f32 %v541, %v714
      %v716 = vpop.f32.mrb[0].mxu0
      %717 = vmatprep.mubr.f32.mxu0 0.0
      %718 = vmatmul.mubr.f32.gmra.mrb[0].mxu0 %v414
      %v719 = vpop.f32.mrb[0].mxu0
      %v720 = vadd.f32 %v541, %v719
      %v721 = vpop.f32.mrb[0].mxu0
      %722 = vmatprep.mubr.f32.mxu0 0.0
      %723 = vmatmul.mubr.f32.gmra.mrb[0].mxu0 %v415
      %v724 = vpop.f32.mrb[0].mxu0
      %v725 = vadd.f32 %v541, %v724
      %v726 = vpop.f32.mrb[0].mxu0
      %727 = vmatprep.mubr.f32.mxu0 0.0
      %728 = vmatmul.mubr.f32.gmra.mrb[0].mxu0 %v416
      %v729 = vpop.f32.mrb[0].mxu0
      %v730 = vadd.f32 %v541, %v729
      %v731 = vpop.f32.mrb[0].mxu0
      %732 = vmatprep.mubr.f32.mxu0 0.0
      %733 = vmatmul.mubr.f32.gmra.mrb[0].mxu0 %v417
      %v734 = vpop.f32.mrb[0].mxu0
      %v735 = vadd.f32 %v541, %v734
      %v736 = vpop.f32.mrb[0].mxu0
      %737 = vmatprep.mubr.f32.mxu0 0.0
      %738 = vmatmul.mubr.f32.gmra.mrb[0].mxu0 %v418
      %v739 = vpop.f32.mrb[0].mxu0
      %v740 = vadd.f32 %v541, %v739
      %v741 = vpop.f32.mrb[0].mxu0
      %742 = vmatprep.mubr.f32.mxu0 0.0
      %743 = vmatmul.mubr.f32.gmra.mrb[0].mxu0 %v419
      %v744 = vpop.f32.mrb[0].mxu0
      %v745 = vadd.f32 %v541, %v744
      %v746 = vpop.f32.mrb[0].mxu0
      %747 = vmatprep.mubr.f32.mxu0 0.0
      %748 = vmatmul.mubr.f32.gmra.mrb[0].mxu0 %v420
      %v749 = vpop.f32.mrb[0].mxu0
      %v750 = vadd.f32 %v541, %v749
      %v751 = vpop.f32.mrb[0].mxu0
      %752 = vmatprep.mubr.f32.mxu0 0.0
      %753 = vmatmul.mubr.f32.gmra.mrb[0].mxu0 %v421
      %v754 = vpop.f32.mrb[0].mxu0
      %v755 = vadd.f32 %v541, %v754
      %v756 = vpop.f32.mrb[0].mxu0
      %757 = vmatprep.mubr.f32.mxu0 0.0
      %758 = vmatmul.mubr.f32.gmra.mrb[0].mxu0 %v422
      %v759 = vpop.f32.mrb[0].mxu0
      %v760 = vadd.f32 %v541, %v759
      %v761 = vpop.f32.mrb[0].mxu0
      %762 = vmatprep.mubr.f32.mxu0 0.0
      %763 = vmatmul.mubr.f32.gmra.mrb[0].mxu0 %v423
      %v764 = vpop.f32.mrb[0].mxu0
      %v765 = vadd.f32 %v541, %v764
      %v766 = vpop.f32.mrb[0].mxu0
      %767 = vmatprep.mubr.f32.mxu0 0.0
      %768 = vmatmul.mubr.f32.gmra.mrb[0].mxu0 %v424
      %v769 = vpop.f32.mrb[0].mxu0
      %v770 = vadd.f32 %v541, %v769
      %v771 = vpop.f32.mrb[0].mxu0
      %772 = vmatprep.mubr.f32.mxu0 0.0
      %773 = vmatmul.mubr.f32.gmra.mrb[0].mxu0 %v425
      %v774 = vpop.f32.mrb[0].mxu0
      %v775 = vadd.f32 %v541, %v774
      %v776 = vpop.f32.mrb[0].mxu0
      %777 = vmatprep.mubr.f32.mxu0 0.0
      %778 = vmatmul.mubr.f32.gmra.mrb[0].mxu0 %v426
      %v779 = vpop.f32.mrb[0].mxu0
      %v780 = vadd.f32 %v541, %v779
      %v781 = vpop.f32.mrb[0].mxu0
      %782 = vmatprep.mubr.f32.mxu0 0.0
      %783 = vmatmul.mubr.f32.gmra.mrb[0].mxu0 %v427
      %v784 = vpop.f32.mrb[0].mxu0
      %v785 = vadd.f32 %v541, %v784
      %v786 = vpop.f32.mrb[0].mxu0
      %787 = vmatprep.mubr.f32.mxu0 0.0
      %788 = vmatmul.mubr.f32.gmra.mrb[0].mxu0 %v428
      %v789 = vpop.f32.mrb[0].mxu0
      %v790 = vadd.f32 %v541, %v789
      %v791 = vpop.f32.mrb[0].mxu0
      %792 = vmatprep.mubr.f32.mxu0 0.0
      %793 = vmatmul.mubr.f32.gmra.mrb[0].mxu0 %v429
      %v794 = vpop.f32.mrb[0].mxu0
      %v795 = vadd.f32 %v541, %v794
      %v796 = vpop.f32.mrb[0].mxu0
      %797 = vmatprep.mubr.f32.mxu0 0.0
      %798 = vmatmul.mubr.f32.gmra.mrb[0].mxu0 %v430
      %v799 = vpop.f32.mrb[0].mxu0
      %v800 = vadd.f32 %v541, %v799
      %v801 = vpop.f32.mrb[0].mxu0
      %802 = vmatprep.mubr.f32.mxu0 0.0
      %803 = vmatmul.mubr.f32.gmra.mrb[0].mxu0 %v431
      %v804 = vpop.f32.mrb[0].mxu0
      %v805 = vadd.f32 %v541, %v804
      %v806 = vpop.f32.mrb[0].mxu0
      %807 = vmatprep.mubr.f32.mxu0 0.0
      %808 = vmatmul.mubr.f32.gmra.mrb[0].mxu0 %v432
      %v809 = vpop.f32.mrb[0].mxu0
      %v810 = vadd.f32 %v541, %v809
      %v811 = vpop.f32.mrb[0].mxu0
      %812 = vmatprep.mubr.f32.mxu0 0.0
      %813 = vmatmul.mubr.f32.gmra.mrb[0].mxu0 %v433
      %v814 = vpop.f32.mrb[0].mxu0
      %v815 = vadd.f32 %v541, %v814
      %v816 = vpop.f32.mrb[0].mxu0
      %817 = vmatprep.mubr.f32.mxu0 0.0
      %818 = vmatmul.mubr.f32.gmra.mrb[0].mxu0 %v434
      %v819 = vpop.f32.mrb[0].mxu0
      %v820 = vadd.f32 %v541, %v819
      %v821 = vpop.f32.mrb[0].mxu0
      %822 = vmatprep.mubr.f32.mxu0 0.0
      %823 = vmatmul.mubr.f32.gmra.mrb[0].mxu0 %v435
      %v824 = vpop.f32.mrb[0].mxu0
      %v825 = vadd.f32 %v541, %v824
      %v826 = vpop.f32.mrb[0].mxu0
      %827 = vmatprep.mubr.f32.mxu0 0.0
      %828 = vmatmul.mubr.f32.gmra.mrb[0].mxu0 %v436
      %v829 = vpop.f32.mrb[0].mxu0
      %v830 = vadd.f32 %v541, %v829
      %v831 = vpop.f32.mrb[0].mxu0
      %832 = vmatprep.mubr.f32.mxu0 0.0
      %833 = vmatmul.mubr.f32.gmra.mrb[0].mxu0 %v437
      %v834 = vpop.f32.mrb[0].mxu0
      %v835 = vadd.f32 %v541, %v834
      %v836 = vpop.f32.mrb[0].mxu0
      %837 = vmatprep.mubr.f32.mxu0 0.0
      %838 = vmatmul.mubr.f32.gmra.mrb[0].mxu0 %v438
      %v839 = vpop.f32.mrb[0].mxu0
      %v840 = vadd.f32 %v541, %v839
      %v841 = vpop.f32.mrb[0].mxu0
      %842 = vmatprep.mubr.f32.mxu0 0.0
      %843 = vmatmul.mubr.f32.gmra.mrb[0].mxu0 %v439
      %v844 = vpop.f32.mrb[0].mxu0
      %v845 = vadd.f32 %v541, %v844
      %v846 = vpop.f32.mrb[0].mxu0
      %847 = vmatprep.mubr.f32.mxu0 0.0
      %848 = vmatmul.mubr.f32.gmra.mrb[0].mxu0 %v440
      %v849 = vpop.f32.mrb[0].mxu0
      %v850 = vadd.f32 %v541, %v849
      %v851 = vpop.f32.mrb[0].mxu0
      %852 = vmatprep.mubr.f32.mxu0 0.0
      %853 = vmatmul.mubr.f32.gmra.mrb[0].mxu0 %v441
      %v854 = vpop.f32.mrb[0].mxu0
      %v855 = vadd.f32 %v541, %v854
      %v856 = vpop.f32.mrb[0].mxu0
      %857 = vmatprep.mubr.f32.mxu0 0.0
      %858 = vmatmul.mubr.f32.gmra.mrb[0].mxu0 %v442
      %v859 = vpop.f32.mrb[0].mxu0
      %v860 = vadd.f32 %v541, %v859
      %v861 = vpop.f32.mrb[0].mxu0
      %862 = vmatprep.mubr.f32.mxu0 0.0
      %863 = vmatmul.mubr.f32.gmra.mrb[0].mxu0 %v443
      %v864 = vpop.f32.mrb[0].mxu0
      %v865 = vadd.f32 %v541, %v864
      %v866 = vpop.f32.mrb[0].mxu0
      %867 = vmatprep.mubr.f32.mxu0 0.0
      %868 = vmatmul.mubr.f32.gmra.mrb[0].mxu0 %v444
      %v869 = vpop.f32.mrb[0].mxu0
      %v870 = vadd.f32 %v541, %v869
      %v871 = vpop.f32.mrb[0].mxu0
      %872 = vmatprep.mubr.f32.mxu0 0.0
      %873 = vmatmul.mubr.f32.gmra.mrb[0].mxu0 %v445
      %v874 = vpop.f32.mrb[0].mxu0
      %v875 = vadd.f32 %v541, %v874
      %v876 = vpop.f32.mrb[0].mxu0
      %877 = vmatprep.mubr.f32.mxu0 0.0
      %878 = vmatmul.mubr.f32.gmra.mrb[0].mxu0 %v446
      %v879 = vpop.f32.mrb[0].mxu0
      %v880 = vadd.f32 %v541, %v879
      %v881 = vpop.f32.mrb[0].mxu0
      %882 = vmatprep.mubr.f32.mxu0 0.0
      %883 = vmatmul.mubr.f32.gmra.mrb[0].mxu0 %v447
      %v884 = vpop.f32.mrb[0].mxu0
      %v885 = vadd.f32 %v541, %v884
      %v886 = vpop.f32.mrb[0].mxu0
      %887 = vmatprep.mubr.f32.mxu0 0.0
      %888 = vmatmul.mubr.f32.gmra.mrb[0].mxu0 %v448
      %v889 = vpop.f32.mrb[0].mxu0
      %v890 = vadd.f32 %v541, %v889
      %v891 = vpop.f32.mrb[0].mxu0
      %892 = vmatprep.mubr.f32.mxu0 0.0
      %893 = vmatmul.mubr.f32.gmra.mrb[0].mxu0 %v449
      %v894 = vpop.f32.mrb[0].mxu0
      %v895 = vadd.f32 %v541, %v894
      %v896 = vpop.f32.mrb[0].mxu0
      %897 = vmatprep.mubr.f32.mxu0 0.0
      %898 = vmatmul.mubr.f32.gmra.mrb[0].mxu0 %v450
      %v899 = vpop.f32.mrb[0].mxu0
      %v900 = vadd.f32 %v541, %v899
      %v901 = vpop.f32.mrb[0].mxu0
      %902 = vmatprep.mubr.f32.mxu0 0.0
      %903 = vmatmul.mubr.f32.gmra.mrb[0].mxu0 %v451
      %v904 = vpop.f32.mrb[0].mxu0
      %v905 = vadd.f32 %v541, %v904
      %v906 = vpop.f32.mrb[0].mxu0
      %907 = vmatprep.mubr.f32.mxu0 0.0
      %908 = vmatmul.mubr.f32.gmra.mrb[0].mxu0 %v452
      %v909 = vpop.f32.mrb[0].mxu0
      %v910 = vadd.f32 %v541, %v909
      %v911 = vpop.f32.mrb[0].mxu0
      %912 = vmatprep.mubr.f32.mxu0 0.0
      %913 = vmatmul.mubr.f32.gmra.mrb[0].mxu0 %v453
      %v914 = vpop.f32.mrb[0].mxu0
      %v915 = vadd.f32 %v541, %v914
      %v916 = vpop.f32.mrb[0].mxu0
      %917 = vmatprep.mubr.f32.mxu0 0.0
      %918 = vmatmul.mubr.f32.gmra.mrb[0].mxu0 %v454
      %v919 = vpop.f32.mrb[0].mxu0
      %v920 = vadd.f32 %v541, %v919
      %v921 = vpop.f32.mrb[0].mxu0
      %922 = vmatprep.mubr.f32.mxu0 0.0
      %923 = vmatmul.mubr.f32.gmra.mrb[0].mxu0 %v455
      %v924 = vpop.f32.mrb[0].mxu0
      %v925 = vadd.f32 %v541, %v924
      %v926 = vpop.f32.mrb[0].mxu0
      %927 = vmatprep.mubr.f32.mxu0 0.0
      %928 = vmatmul.mubr.f32.gmra.mrb[0].mxu0 %v456
      %v929 = vpop.f32.mrb[0].mxu0
      %v930 = vadd.f32 %v541, %v929
      %v931 = vpop.f32.mrb[0].mxu0
      %932 = vmatprep.mubr.f32.mxu0 0.0
      %933 = vmatmul.mubr.f32.gmra.mrb[0].mxu0 %v457
      %v934 = vpop.f32.mrb[0].mxu0
      %v935 = vadd.f32 %v541, %v934
      %v936 = vpop.f32.mrb[0].mxu0
      %937 = vmatprep.mubr.f32.mxu0 0.0
      %938 = vmatmul.mubr.f32.gmra.mrb[0].mxu0 %v458
      %v939 = vpop.f32.mrb[0].mxu0
      %v940 = vadd.f32 %v541, %v939
      %v941 = vpop.f32.mrb[0].mxu0
      %942 = vmatprep.mubr.f32.mxu0 0.0
      %943 = vmatmul.mubr.f32.gmra.mrb[0].mxu0 %v459
      %v944 = vpop.f32.mrb[0].mxu0
      %v945 = vadd.f32 %v541, %v944
      %v946 = vpop.f32.mrb[0].mxu0
      %947 = vmatprep.mubr.f32.mxu0 0.0
      %948 = vmatmul.mubr.f32.gmra.mrb[0].mxu0 %v460
      %v949 = vpop.f32.mrb[0].mxu0
      %v950 = vadd.f32 %v541, %v949
      %v951 = vpop.f32.mrb[0].mxu0
      %952 = vmatprep.mubr.f32.mxu0 0.0
      %953 = vmatmul.mubr.f32.gmra.mrb[0].mxu0 %v461
      %v954 = vpop.f32.mrb[0].mxu0
      %v955 = vadd.f32 %v541, %v954
      %v956 = vpop.f32.mrb[0].mxu0
      %957 = vmatprep.mubr.f32.mxu0 0.0
      %958 = vmatmul.mubr.f32.gmra.mrb[0].mxu0 %v462
      %v959 = vpop.f32.mrb[0].mxu0
      %v960 = vadd.f32 %v541, %v959
      %v961 = vpop.f32.mrb[0].mxu0
      %962 = vmatprep.mubr.f32.mxu0 0.0
      %963 = vmatmul.mubr.f32.gmra.mrb[0].mxu0 %v463
      %v964 = vpop.f32.mrb[0].mxu0
      %v965 = vadd.f32 %v541, %v964
      %v966 = vpop.f32.mrb[0].mxu0
      %967 = vmatprep.mubr.f32.mxu0 0.0
      %968 = vmatmul.mubr.f32.gmra.mrb[0].mxu0 %v464
      %v969 = vpop.f32.mrb[0].mxu0
      %v970 = vadd.f32 %v541, %v969
      %v971 = vpop.f32.mrb[0].mxu0
      %972 = vmatprep.mubr.f32.mxu0 0.0
      %973 = vmatmul.mubr.f32.gmra.mrb[0].mxu0 %v465
      %v974 = vpop.f32.mrb[0].mxu0
      %v975 = vadd.f32 %v541, %v974
      %v976 = vpop.f32.mrb[0].mxu0
      %977 = vmatprep.mubr.f32.mxu0 0.0
      %978 = vmatmul.mubr.f32.gmra.mrb[0].mxu0 %v466
      %v979 = vpop.f32.mrb[0].mxu0
      %v980 = vadd.f32 %v541, %v979
      %v981 = vpop.f32.mrb[0].mxu0
      %982 = vmatprep.mubr.f32.mxu0 0.0
      %983 = vmatmul.mubr.f32.gmra.mrb[0].mxu0 %v467
      %v984 = vpop.f32.mrb[0].mxu0
      %v985 = vadd.f32 %v541, %v984
      %v986 = vpop.f32.mrb[0].mxu0
      %987 = vmatprep.mubr.f32.mxu0 0.0
      %988 = vmatmul.mubr.f32.gmra.mrb[0].mxu0 %v468
      %v989 = vpop.f32.mrb[0].mxu0
      %v990 = vadd.f32 %v541, %v989
      %v991 = vpop.f32.mrb[0].mxu0
      %992 = vmatprep.mubr.f32.mxu0 0.0
      %993 = vmatmul.mubr.f32.gmra.mrb[0].mxu0 %v469
      %v994 = vpop.f32.mrb[0].mxu0
      %v995 = vadd.f32 %v541, %v994
      %v996 = vpop.f32.mrb[0].mxu0
      %997 = vmatprep.mubr.f32.mxu0 0.0
      %998 = vmatmul.mubr.f32.gmra.mrb[0].mxu0 %v470
      %v999 = vpop.f32.mrb[0].mxu0
      %v1000 = vadd.f32 %v541, %v999
      %v1001 = vpop.f32.mrb[0].mxu0
      %1002 = vmatprep.mubr.f32.mxu0 0.0
      %1003 = vmatmul.mubr.f32.gmra.mrb[0].mxu0 %v471
      %v1004 = vpop.f32.mrb[0].mxu0
      %v1005 = vadd.f32 %v541, %v1004
      %v1006 = vpop.f32.mrb[0].mxu0
      %1007 = vmatprep.mubr.f32.mxu0 0.0
      %1008 = vmatmul.mubr.f32.gmra.mrb[0].mxu0 %v472
      %v1009 = vpop.f32.mrb[0].mxu0
      %v1010 = vadd.f32 %v541, %v1009
      %v1011 = vpop.f32.mrb[0].mxu0
      %1012 = vmatprep.mubr.f32.mxu0 0.0
      %1013 = vmatmul.mubr.f32.gmra.mrb[0].mxu0 %v473
      %v1014 = vpop.f32.mrb[0].mxu0
      %v1015 = vadd.f32 %v541, %v1014
      %v1016 = vpop.f32.mrb[0].mxu0
      %1017 = vmatprep.mubr.f32.mxu0 0.0
      %1018 = vmatmul.mubr.f32.gmra.mrb[0].mxu0 %v474
      %v1019 = vpop.f32.mrb[0].mxu0
      %v1020 = vadd.f32 %v541, %v1019
      %v1021 = vpop.f32.mrb[0].mxu0
      %1022 = vmatprep.mubr.f32.mxu0 0.0
      %1023 = vmatmul.mubr.f32.gmra.mrb[0].mxu0 %v475
      %v1024 = vpop.f32.mrb[0].mxu0
      %v1025 = vadd.f32 %v541, %v1024
      %v1026 = vpop.f32.mrb[0].mxu0
      %1027 = vmatprep.mubr.f32.mxu0 0.0
      %1028 = vmatmul.mubr.f32.gmra.mrb[0].mxu0 %v476
      %v1029 = vpop.f32.mrb[0].mxu0
      %v1030 = vadd.f32 %v541, %v1029
      %v1031 = vpop.f32.mrb[0].mxu0
      %1032 = vmatprep.mubr.f32.mxu0 0.0
      %1033 = vmatmul.mubr.f32.gmra.mrb[0].mxu0 %v477
      %v1034 = vpop.f32.mrb[0].mxu0
      %v1035 = vadd.f32 %v541, %v1034
      %v1036 = vpop.f32.mrb[0].mxu0
      %1037 = vmatprep.mubr.f32.mxu0 0.0
      %1038 = vmatmul.mubr.f32.gmra.mrb[0].mxu0 %v478
      %v1039 = vpop.f32.mrb[0].mxu0
      %v1040 = vadd.f32 %v541, %v1039
      %v1041 = vpop.f32.mrb[0].mxu0
      %1042 = vmatprep.mubr.f32.mxu0 0.0
      %1043 = vmatmul.mubr.f32.gmra.mrb[0].mxu0 %v479
      %v1044 = vpop.f32.mrb[0].mxu0
      %v1045 = vadd.f32 %v541, %v1044
      %v1046 = vpop.f32.mrb[0].mxu0
      %1047 = vmatprep.mubr.f32.mxu0 0.0
      %1048 = vmatmul.mubr.f32.gmra.mrb[0].mxu0 %v480
      %v1049 = vpop.f32.mrb[0].mxu0
      %v1050 = vadd.f32 %v541, %v1049
      %v1051 = vpop.f32.mrb[0].mxu0
      %1052 = vmatprep.mubr.f32.mxu0 0.0
      %1053 = vmatmul.mubr.f32.gmra.mrb[0].mxu0 %v481
      %v1054 = vpop.f32.mrb[0].mxu0
      %v1055 = vadd.f32 %v541, %v1054
      %v1056 = vpop.f32.mrb[0].mxu0
      %1057 = vmatprep.mubr.f32.mxu0 0.0
      %1058 = vmatmul.mubr.f32.gmra.mrb[0].mxu0 %v482
      %v1059 = vpop.f32.mrb[0].mxu0
      %v1060 = vadd.f32 %v541, %v1059
      %v1061 = vpop.f32.mrb[0].mxu0
      %1062 = vmatprep.mubr.f32.mxu0 0.0
      %1063 = vmatmul.mubr.f32.gmra.mrb[0].mxu0 %v483
      %v1064 = vpop.f32.mrb[0].mxu0
      %v1065 = vadd.f32 %v541, %v1064
      %v1066 = vpop.f32.mrb[0].mxu0
      %1067 = vmatprep.mubr.f32.mxu0 0.0
      %1068 = vmatmul.mubr.f32.gmra.mrb[0].mxu0 %v484
      %v1069 = vpop.f32.mrb[0].mxu0
      %v1070 = vadd.f32 %v541, %v1069
      %v1071 = vpop.f32.mrb[0].mxu0
      %1072 = vmatprep.mubr.f32.mxu0 0.0
      %1073 = vmatmul.mubr.f32.gmra.mrb[0].mxu0 %v485
      %v1074 = vpop.f32.mrb[0].mxu0
      %v1075 = vadd.f32 %v541, %v1074
      %v1076 = vpop.f32.mrb[0].mxu0
      %1077 = vmatprep.mubr.f32.mxu0 0.0
      %1078 = vmatmul.mubr.f32.gmra.mrb[0].mxu0 %v486
      %v1079 = vpop.f32.mrb[0].mxu0
      %v1080 = vadd.f32 %v541, %v1079
      %v1081 = vpop.f32.mrb[0].mxu0
      %1082 = vmatprep.mubr.f32.mxu0 0.0
      %1083 = vmatmul.mubr.f32.gmra.mrb[0].mxu0 %v487
      %v1084 = vpop.f32.mrb[0].mxu0
      %v1085 = vadd.f32 %v541, %v1084
      %v1086 = vpop.f32.mrb[0].mxu0
      %1087 = vmatprep.mubr.f32.mxu0 0.0
      %1088 = vmatmul.mubr.f32.gmra.mrb[0].mxu0 %v488
      %v1089 = vpop.f32.mrb[0].mxu0
      %v1090 = vadd.f32 %v541, %v1089
      %v1091 = vpop.f32.mrb[0].mxu0
      %1092 = vmatprep.mubr.f32.mxu0 0.0
      %1093 = vmatmul.mubr.f32.gmra.mrb[0].mxu0 %v489
      %v1094 = vpop.f32.mrb[0].mxu0
      %v1095 = vadd.f32 %v541, %v1094
      %v1096 = vpop.f32.mrb[0].mxu0
      %1097 = vmatprep.mubr.f32.mxu0 0.0
      %1098 = vmatmul.mubr.f32.gmra.mrb[0].mxu0 %v490
      %v1099 = vpop.f32.mrb[0].mxu0
      %v1100 = vadd.f32 %v541, %v1099
      %v1101 = vpop.f32.mrb[0].mxu0
      %1102 = vmatprep.mubr.f32.mxu0 0.0
      %1103 = vmatmul.mubr.f32.gmra.mrb[0].mxu0 %v491
      %v1104 = vpop.f32.mrb[0].mxu0
      %v1105 = vadd.f32 %v541, %v1104
      %v1106 = vpop.f32.mrb[0].mxu0
      %1107 = vmatprep.mubr.f32.mxu0 0.0
      %1108 = vmatmul.mubr.f32.gmra.mrb[0].mxu0 %v492
      %v1109 = vpop.f32.mrb[0].mxu0
      %v1110 = vadd.f32 %v541, %v1109
      %v1111 = vpop.f32.mrb[0].mxu0
      %1112 = vmatprep.mubr.f32.mxu0 0.0
      %1113 = vmatmul.mubr.f32.gmra.mrb[0].mxu0 %v493
      %v1114 = vpop.f32.mrb[0].mxu0
      %v1115 = vadd.f32 %v541, %v1114
      %v1116 = vpop.f32.mrb[0].mxu0
      %1117 = vmatprep.mubr.f32.mxu0 0.0
      %1118 = vmatmul.mubr.f32.gmra.mrb[0].mxu0 %v494
      %v1119 = vpop.f32.mrb[0].mxu0
      %v1120 = vadd.f32 %v541, %v1119
      %v1121 = vpop.f32.mrb[0].mxu0
      %1122 = vmatprep.mubr.f32.mxu0 0.0
      %1123 = vmatmul.mubr.f32.gmra.mrb[0].mxu0 %v495
      %v1124 = vpop.f32.mrb[0].mxu0
      %v1125 = vadd.f32 %v541, %v1124
      %v1126 = vpop.f32.mrb[0].mxu0
      %1127 = vmatprep.mubr.f32.mxu0 0.0
      %1128 = vmatmul.mubr.f32.gmra.mrb[0].mxu0 %v496
      %v1129 = vpop.f32.mrb[0].mxu0
      %v1130 = vadd.f32 %v541, %v1129
      %v1131 = vpop.f32.mrb[0].mxu0
      %1132 = vmatprep.mubr.f32.mxu0 0.0
      %1133 = vmatmul.mubr.f32.gmra.mrb[0].mxu0 %v497
      %v1134 = vpop.f32.mrb[0].mxu0
      %v1135 = vadd.f32 %v541, %v1134
      %v1136 = vpop.f32.mrb[0].mxu0
      %1137 = vmatprep.mubr.f32.mxu0 0.0
      %1138 = vmatmul.mubr.f32.gmra.mrb[0].mxu0 %v498
      %v1139 = vpop.f32.mrb[0].mxu0
      %v1140 = vadd.f32 %v541, %v1139
      %v1141 = vpop.f32.mrb[0].mxu0
      %1142 = vmatprep.mubr.f32.mxu0 0.0
      %1143 = vmatmul.mubr.f32.gmra.mrb[0].mxu0 %v499
      %v1144 = vpop.f32.mrb[0].mxu0
      %v1145 = vadd.f32 %v541, %v1144
      %v1146 = vpop.f32.mrb[0].mxu0
      %1147 = vmatprep.mubr.f32.mxu0 0.0
      %1148 = vmatmul.mubr.f32.gmra.mrb[0].mxu0 %v500
      %v1149 = vpop.f32.mrb[0].mxu0
      %v1150 = vadd.f32 %v541, %v1149
      %v1151 = vpop.f32.mrb[0].mxu0
      %1152 = vmatprep.mubr.f32.mxu0 0.0
      %1153 = vmatmul.mubr.f32.gmra.mrb[0].mxu0 %v501
      %v1154 = vpop.f32.mrb[0].mxu0
      %v1155 = vadd.f32 %v541, %v1154
      %v1156 = vpop.f32.mrb[0].mxu0
      %1157 = vmatprep.mubr.f32.mxu0 0.0
      %1158 = vmatmul.mubr.f32.gmra.mrb[0].mxu0 %v502
      %v1159 = vpop.f32.mrb[0].mxu0
      %v1160 = vadd.f32 %v541, %v1159
      %v1161 = vpop.f32.mrb[0].mxu0
      %1162 = vmatprep.mubr.f32.mxu0 0.0
      %1163 = vmatmul.mubr.f32.gmra.mrb[0].mxu0 %v503
      %v1164 = vpop.f32.mrb[0].mxu0
      %v1165 = vadd.f32 %v541, %v1164
      %v1166 = vpop.f32.mrb[0].mxu0
      %1167 = vmatprep.mubr.f32.mxu0 0.0
      %1168 = vmatmul.mubr.f32.gmra.mrb[0].mxu0 %v504
      %v1169 = vpop.f32.mrb[0].mxu0
      %v1170 = vadd.f32 %v541, %v1169
      %v1171 = vpop.f32.mrb[0].mxu0
      %1172 = vmatprep.mubr.f32.mxu0 0.0
      %1173 = vmatmul.mubr.f32.gmra.mrb[0].mxu0 %v505
      %v1174 = vpop.f32.mrb[0].mxu0
      %v1175 = vadd.f32 %v541, %v1174
      %v1176 = vpop.f32.mrb[0].mxu0
      %1177 = vmatprep.mubr.f32.mxu0 0.0
      %1178 = vmatmul.mubr.f32.gmra.mrb[0].mxu0 %v506
      %v1179 = vpop.f32.mrb[0].mxu0
      %v1180 = vadd.f32 %v541, %v1179
      %v1181 = vpop.f32.mrb[0].mxu0
      %1182 = vmatprep.mubr.f32.mxu0 0.0
      %1183 = vmatmul.mubr.f32.gmra.mrb[0].mxu0 %v507
      %v1184 = vpop.f32.mrb[0].mxu0
      %v1185 = vadd.f32 %v541, %v1184
      %v1186 = vpop.f32.mrb[0].mxu0
      %1187 = vmatprep.mubr.f32.mxu0 0.0
      %1188 = vmatmul.mubr.f32.gmra.mrb[0].mxu0 %v508
      %v1189 = vpop.f32.mrb[0].mxu0
      %v1190 = vadd.f32 %v541, %v1189
      %v1191 = vpop.f32.mrb[0].mxu0
      %1192 = vmatprep.mubr.f32.mxu0 0.0
      %1193 = vmatmul.mubr.f32.gmra.mrb[0].mxu0 %v509
      %v1194 = vpop.f32.mrb[0].mxu0
      %v1195 = vadd.f32 %v541, %v1194
      %v1196 = vpop.f32.mrb[0].mxu0
      %1197 = vmatprep.mubr.f32.mxu0 0.0
      %1198 = vmatmul.mubr.f32.gmra.mrb[0].mxu0 %v510
      %v1199 = vpop.f32.mrb[0].mxu0
      %v1200 = vadd.f32 %v541, %v1199
      %v1201 = vpop.f32.mrb[0].mxu0
      %1202 = vmatprep.mubr.f32.mxu0 0.0
      %1203 = vmatmul.mubr.f32.gmra.mrb[0].mxu0 %v511
      %v1204 = vpop.f32.mrb[0].mxu0
      %v1205 = vadd.f32 %v541, %v1204
      %v1206 = vpop.f32.mrb[0].mxu0
      %1207 = vmatprep.mubr.f32.mxu0 0.0
      %1208 = vmatmul.mubr.f32.gmra.mrb[0].mxu0 %v512
      %v1209 = vpop.f32.mrb[0].mxu0
      %v1210 = vadd.f32 %v541, %v1209
      %v1211 = vpop.f32.mrb[0].mxu0
      %1212 = vmatprep.mubr.f32.mxu0 0.0
      %1213 = vmatmul.mubr.f32.gmra.mrb[0].mxu0 %v513
      %v1214 = vpop.f32.mrb[0].mxu0
      %v1215 = vadd.f32 %v541, %v1214
      %v1216 = vpop.f32.mrb[0].mxu0
      %1217 = vmatprep.mubr.f32.mxu0 0.0
      %1218 = vmatmul.mubr.f32.gmra.mrb[0].mxu0 %v514
      %v1219 = vpop.f32.mrb[0].mxu0
      %v1220 = vadd.f32 %v541, %v1219
      %v1221 = vpop.f32.mrb[0].mxu0
      %1222 = vmatprep.mubr.f32.mxu0 0.0
      %1223 = vmatmul.mubr.f32.gmra.mrb[0].mxu0 %v515
      %v1224 = vpop.f32.mrb[0].mxu0
      %v1225 = vadd.f32 %v541, %v1224
      %v1226 = vpop.f32.mrb[0].mxu0
      %1227 = vmatprep.mubr.f32.mxu0 0.0
      %1228 = vmatmul.mubr.f32.gmra.mrb[0].mxu0 %v516
      %v1229 = vpop.f32.mrb[0].mxu0
      %v1230 = vadd.f32 %v541, %v1229
      %v1231 = vpop.f32.mrb[0].mxu0
      %1232 = vmatprep.mubr.f32.mxu0 0.0
      %1233 = vmatmul.mubr.f32.gmra.mrb[0].mxu0 %v517
      %v1234 = vpop.f32.mrb[0].mxu0
      %v1235 = vadd.f32 %v541, %v1234
      %v1236 = vpop.f32.mrb[0].mxu0
      %1237 = vmatprep.mubr.f32.mxu0 0.0
      %1238 = vmatmul.mubr.f32.gmra.mrb[0].mxu0 %v518
      %v1239 = vpop.f32.mrb[0].mxu0
      %v1240 = vadd.f32 %v541, %v1239
      %v1241 = vpop.f32.mrb[0].mxu0
      %1242 = vmatprep.mubr.f32.mxu0 0.0
      %1243 = vmatmul.mubr.f32.gmra.mrb[0].mxu0 %v519
      %v1244 = vpop.f32.mrb[0].mxu0
      %v1245 = vadd.f32 %v541, %v1244
      %v1246 = vpop.f32.mrb[0].mxu0
      %1247 = vdwg.mxu0
      %v1248 = vmax.f32 %v610, 0.0
      %v1249 = vmax.f32 %v615, 0.0
      %v1250 = vmax.f32 %v620, 0.0
      %v1251 = vmax.f32 %v625, 0.0
      %v1252 = vmax.f32 %v630, 0.0
      %v1253 = vmax.f32 %v635, 0.0
      %v1254 = vmax.f32 %v640, 0.0
      %v1255 = vmax.f32 %v645, 0.0
      %v1256 = vmax.f32 %v650, 0.0
      %v1257 = vmax.f32 %v655, 0.0
      %v1258 = vmax.f32 %v660, 0.0
      %v1259 = vmax.f32 %v665, 0.0
      %v1260 = vmax.f32 %v670, 0.0
      %v1261 = vmax.f32 %v675, 0.0
      %v1262 = vmax.f32 %v680, 0.0
      %v1263 = vmax.f32 %v685, 0.0
      %v1264 = vmax.f32 %v690, 0.0
      %v1265 = vmax.f32 %v695, 0.0
      %v1266 = vmax.f32 %v700, 0.0
      %v1267 = vmax.f32 %v705, 0.0
      %v1268 = vmax.f32 %v710, 0.0
      %v1269 = vmax.f32 %v715, 0.0
      %v1270 = vmax.f32 %v720, 0.0
      %v1271 = vmax.f32 %v725, 0.0
      %v1272 = vmax.f32 %v730, 0.0
      %v1273 = vmax.f32 %v735, 0.0
      %v1274 = vmax.f32 %v740, 0.0
      %v1275 = vmax.f32 %v745, 0.0
      %v1276 = vmax.f32 %v750, 0.0
      %v1277 = vmax.f32 %v755, 0.0
      %v1278 = vmax.f32 %v760, 0.0
      %v1279 = vmax.f32 %v765, 0.0
      %v1280 = vmax.f32 %v770, 0.0
      %v1281 = vmax.f32 %v775, 0.0
      %v1282 = vmax.f32 %v780, 0.0
      %v1283 = vmax.f32 %v785, 0.0
      %v1284 = vmax.f32 %v790, 0.0
      %v1285 = vmax.f32 %v795, 0.0
      %v1286 = vmax.f32 %v800, 0.0
      %v1287 = vmax.f32 %v805, 0.0
      %v1288 = vmax.f32 %v810, 0.0
      %v1289 = vmax.f32 %v815, 0.0
      %v1290 = vmax.f32 %v820, 0.0
      %v1291 = vmax.f32 %v825, 0.0
      %v1292 = vmax.f32 %v830, 0.0
      %v1293 = vmax.f32 %v835, 0.0
      %v1294 = vmax.f32 %v840, 0.0
      %v1295 = vmax.f32 %v845, 0.0
      %v1296 = vmax.f32 %v850, 0.0
      %v1297 = vmax.f32 %v855, 0.0
      %v1298 = vmax.f32 %v860, 0.0
      %v1299 = vmax.f32 %v865, 0.0
      %v1300 = vmax.f32 %v870, 0.0
      %v1301 = vmax.f32 %v875, 0.0
      %v1302 = vmax.f32 %v880, 0.0
      %v1303 = vmax.f32 %v885, 0.0
      %v1304 = vmax.f32 %v890, 0.0
      %v1305 = vmax.f32 %v895, 0.0
      %v1306 = vmax.f32 %v900, 0.0
      %v1307 = vmax.f32 %v905, 0.0
      %v1308 = vmax.f32 %v910, 0.0
      %v1309 = vmax.f32 %v915, 0.0
      %v1310 = vmax.f32 %v920, 0.0
      %v1311 = vmax.f32 %v925, 0.0
      %v1312 = vmax.f32 %v930, 0.0
      %v1313 = vmax.f32 %v935, 0.0
      %v1314 = vmax.f32 %v940, 0.0
      %v1315 = vmax.f32 %v945, 0.0
      %v1316 = vmax.f32 %v950, 0.0
      %v1317 = vmax.f32 %v955, 0.0
      %v1318 = vmax.f32 %v960, 0.0
      %v1319 = vmax.f32 %v965, 0.0
      %v1320 = vmax.f32 %v970, 0.0
      %v1321 = vmax.f32 %v975, 0.0
      %v1322 = vmax.f32 %v980, 0.0
      %v1323 = vmax.f32 %v985, 0.0
      %v1324 = vmax.f32 %v990, 0.0
      %v1325 = vmax.f32 %v995, 0.0
      %v1326 = vmax.f32 %v1000, 0.0
      %v1327 = vmax.f32 %v1005, 0.0
      %v1328 = vmax.f32 %v1010, 0.0
      %v1329 = vmax.f32 %v1015, 0.0
      %v1330 = vmax.f32 %v1020, 0.0
      %v1331 = vmax.f32 %v1025, 0.0
      %v1332 = vmax.f32 %v1030, 0.0
      %v1333 = vmax.f32 %v1035, 0.0
      %v1334 = vmax.f32 %v1040, 0.0
      %v1335 = vmax.f32 %v1045, 0.0
      %v1336 = vmax.f32 %v1050, 0.0
      %v1337 = vmax.f32 %v1055, 0.0
      %v1338 = vmax.f32 %v1060, 0.0
      %v1339 = vmax.f32 %v1065, 0.0
      %v1340 = vmax.f32 %v1070, 0.0
      %v1341 = vmax.f32 %v1075, 0.0
      %v1342 = vmax.f32 %v1080, 0.0
      %v1343 = vmax.f32 %v1085, 0.0
      %v1344 = vmax.f32 %v1090, 0.0
      %v1345 = vmax.f32 %v1095, 0.0
      %v1346 = vmax.f32 %v1100, 0.0
      %v1347 = vmax.f32 %v1105, 0.0
      %v1348 = vmax.f32 %v1110, 0.0
      %v1349 = vmax.f32 %v1115, 0.0
      %v1350 = vmax.f32 %v1120, 0.0
      %v1351 = vmax.f32 %v1125, 0.0
      %v1352 = vmax.f32 %v1130, 0.0
      %v1353 = vmax.f32 %v1135, 0.0
      %v1354 = vmax.f32 %v1140, 0.0
      %v1355 = vmax.f32 %v1145, 0.0
      %v1356 = vmax.f32 %v1150, 0.0
      %v1357 = vmax.f32 %v1155, 0.0
      %v1358 = vmax.f32 %v1160, 0.0
      %v1359 = vmax.f32 %v1165, 0.0
      %v1360 = vmax.f32 %v1170, 0.0
      %v1361 = vmax.f32 %v1175, 0.0
      %v1362 = vmax.f32 %v1180, 0.0
      %v1363 = vmax.f32 %v1185, 0.0
      %v1364 = vmax.f32 %v1190, 0.0
      %v1365 = vmax.f32 %v1195, 0.0
      %v1366 = vmax.f32 %v1200, 0.0
      %v1367 = vmax.f32 %v1205, 0.0
      %v1368 = vmax.f32 %v1210, 0.0
      %v1369 = vmax.f32 %v1215, 0.0
      %v1370 = vmax.f32 %v1220, 0.0
      %v1371 = vmax.f32 %v1225, 0.0
      %v1372 = vmax.f32 %v1230, 0.0
      %v1373 = vmax.f32 %v1235, 0.0
      %v1374 = vmax.f32 %v1240, 0.0
      %v1375 = vmax.f32 %v1245, 0.0
      %v1376 = vld [vmem:[%s1] sm:$0xff]
      %v1377 = vld [vmem:[%s1 + $0x8] sm:$0xff]
      %v1378 = vld [vmem:[%s1 + $0x10] sm:$0xff]
      %v1379 = vld [vmem:[%s1 + $0x18] sm:$0xff]
      %v1384 = vcombine.high %v1376, %v1376
      %v1385 = vcombine.high %v1377, %v1377
      %v1386 = vcombine.high %v1378, %v1378
      %v1387 = vcombine.high %v1379, %v1379
      %1392 = vmatprep.subr.mxu0 0.0
      %1393 = vmatpush1.msra.mxu0 %v1248
      %1394 = vmatprep.subr.mxu0 0.0
      %1395 = vmatpush1.msra.mxu0 %v1249
      %1396 = vmatprep.subr.mxu0 0.0
      %1397 = vmatpush1.msra.mxu0 %v1250
      %1398 = vmatprep.subr.mxu0 0.0
      %1399 = vmatpush1.msra.mxu0 %v1251
      %1400 = vmatprep.subr.mxu0 0.0
      %1401 = vmatpush1.msra.mxu0 %v1252
      %1402 = vmatprep.subr.mxu0 0.0
      %1403 = vmatpush1.msra.mxu0 %v1253
      %1404 = vmatprep.subr.mxu0 0.0
      %1405 = vmatpush1.msra.mxu0 %v1254
      %1406 = vmatprep.subr.mxu0 0.0
      %1407 = vmatpush1.msra.mxu0 %v1255
      %1408 = vmatprep.subr.mxu0 0.0
      %1409 = vmatpush1.msra.mxu0 %v1256
      %1410 = vmatprep.subr.mxu0 0.0
      %1411 = vmatpush1.msra.mxu0 %v1257
      %1412 = vmatprep.subr.mxu0 0.0
      %1413 = vmatpush1.msra.mxu0 %v1258
      %1414 = vmatprep.subr.mxu0 0.0
      %1415 = vmatpush1.msra.mxu0 %v1259
      %1416 = vmatprep.subr.mxu0 0.0
      %1417 = vmatpush1.msra.mxu0 %v1260
      %1418 = vmatprep.subr.mxu0 0.0
      %1419 = vmatpush1.msra.mxu0 %v1261
      %1420 = vmatprep.subr.mxu0 0.0
      %1421 = vmatpush1.msra.mxu0 %v1262
      %1422 = vmatprep.subr.mxu0 0.0
      %1423 = vmatpush1.msra.mxu0 %v1263
      %1424 = vmatprep.subr.mxu0 0.0
      %1425 = vmatpush1.msra.mxu0 %v1264
      %1426 = vmatprep.subr.mxu0 0.0
      %1427 = vmatpush1.msra.mxu0 %v1265
      %1428 = vmatprep.subr.mxu0 0.0
      %1429 = vmatpush1.msra.mxu0 %v1266
      %1430 = vmatprep.subr.mxu0 0.0
      %1431 = vmatpush1.msra.mxu0 %v1267
      %1432 = vmatprep.subr.mxu0 0.0
      %1433 = vmatpush1.msra.mxu0 %v1268
      %1434 = vmatprep.subr.mxu0 0.0
      %1435 = vmatpush1.msra.mxu0 %v1269
      %1436 = vmatprep.subr.mxu0 0.0
      %1437 = vmatpush1.msra.mxu0 %v1270
      %1438 = vmatprep.subr.mxu0 0.0
      %1439 = vmatpush1.msra.mxu0 %v1271
      %1440 = vmatprep.subr.mxu0 0.0
      %1441 = vmatpush1.msra.mxu0 %v1272
      %1442 = vmatprep.subr.mxu0 0.0
      %1443 = vmatpush1.msra.mxu0 %v1273
      %1444 = vmatprep.subr.mxu0 0.0
      %1445 = vmatpush1.msra.mxu0 %v1274
      %1446 = vmatprep.subr.mxu0 0.0
      %1447 = vmatpush1.msra.mxu0 %v1275
      %1448 = vmatprep.subr.mxu0 0.0
      %1449 = vmatpush1.msra.mxu0 %v1276
      %1450 = vmatprep.subr.mxu0 0.0
      %1451 = vmatpush1.msra.mxu0 %v1277
      %1452 = vmatprep.subr.mxu0 0.0
      %1453 = vmatpush1.msra.mxu0 %v1278
      %1454 = vmatprep.subr.mxu0 0.0
      %1455 = vmatpush1.msra.mxu0 %v1279
      %1456 = vmatprep.mubr.f32.mxu0 %v1384
      %1457 = vmatmul.mubr.f32.gmra.mrb[0].mxu0 %v1376
      %v1458 = vpop.f32.mrb[0].mxu0
      %v1459 = vadd.f32 0.0, %v1458
      %v1460 = vpop.f32.mrb[0].mxu0
      %1461 = vdwg.mxu0
      %1462 = vmatprep.subr.mxu0 0.0
      %1463 = vmatpush1.msra.mxu0 %v1280
      %1464 = vmatprep.subr.mxu0 0.0
      %1465 = vmatpush1.msra.mxu0 %v1281
      %1466 = vmatprep.subr.mxu0 0.0
      %1467 = vmatpush1.msra.mxu0 %v1282
      %1468 = vmatprep.subr.mxu0 0.0
      %1469 = vmatpush1.msra.mxu0 %v1283
      %1470 = vmatprep.subr.mxu0 0.0
      %1471 = vmatpush1.msra.mxu0 %v1284
      %1472 = vmatprep.subr.mxu0 0.0
      %1473 = vmatpush1.msra.mxu0 %v1285
      %1474 = vmatprep.subr.mxu0 0.0
      %1475 = vmatpush1.msra.mxu0 %v1286
      %1476 = vmatprep.subr.mxu0 0.0
      %1477 = vmatpush1.msra.mxu0 %v1287
      %1478 = vmatprep.subr.mxu0 0.0
      %1479 = vmatpush1.msra.mxu0 %v1288
      %1480 = vmatprep.subr.mxu0 0.0
      %1481 = vmatpush1.msra.mxu0 %v1289
      %1482 = vmatprep.subr.mxu0 0.0
      %1483 = vmatpush1.msra.mxu0 %v1290
      %1484 = vmatprep.subr.mxu0 0.0
      %1485 = vmatpush1.msra.mxu0 %v1291
      %1486 = vmatprep.subr.mxu0 0.0
      %1487 = vmatpush1.msra.mxu0 %v1292
      %1488 = vmatprep.subr.mxu0 0.0
      %1489 = vmatpush1.msra.mxu0 %v1293
      %1490 = vmatprep.subr.mxu0 0.0
      %1491 = vmatpush1.msra.mxu0 %v1294
      %1492 = vmatprep.subr.mxu0 0.0
      %1493 = vmatpush1.msra.mxu0 %v1295
      %1494 = vmatprep.subr.mxu0 0.0
      %1495 = vmatpush1.msra.mxu0 %v1296
      %1496 = vmatprep.subr.mxu0 0.0
      %1497 = vmatpush1.msra.mxu0 %v1297
      %1498 = vmatprep.subr.mxu0 0.0
      %1499 = vmatpush1.msra.mxu0 %v1298
      %1500 = vmatprep.subr.mxu0 0.0
      %1501 = vmatpush1.msra.mxu0 %v1299
      %1502 = vmatprep.subr.mxu0 0.0
      %1503 = vmatpush1.msra.mxu0 %v1300
      %1504 = vmatprep.subr.mxu0 0.0
      %1505 = vmatpush1.msra.mxu0 %v1301
      %1506 = vmatprep.subr.mxu0 0.0
      %1507 = vmatpush1.msra.mxu0 %v1302
      %1508 = vmatprep.subr.mxu0 0.0
      %1509 = vmatpush1.msra.mxu0 %v1303
      %1510 = vmatprep.subr.mxu0 0.0
      %1511 = vmatpush1.msra.mxu0 %v1304
      %1512 = vmatprep.subr.mxu0 0.0
      %1513 = vmatpush1.msra.mxu0 %v1305
      %1514 = vmatprep.subr.mxu0 0.0
      %1515 = vmatpush1.msra.mxu0 %v1306
      %1516 = vmatprep.subr.mxu0 0.0
      %1517 = vmatpush1.msra.mxu0 %v1307
      %1518 = vmatprep.subr.mxu0 0.0
      %1519 = vmatpush1.msra.mxu0 %v1308
      %1520 = vmatprep.subr.mxu0 0.0
      %1521 = vmatpush1.msra.mxu0 %v1309
      %1522 = vmatprep.subr.mxu0 0.0
      %1523 = vmatpush1.msra.mxu0 %v1310
      %1524 = vmatprep.subr.mxu0 0.0
      %1525 = vmatpush1.msra.mxu0 %v1311
      %1526 = vmatprep.mubr.f32.mxu0 %v1385
      %1527 = vmatmul.mubr.f32.gmra.mrb[0].mxu0 %v1377
      %v1528 = vpop.f32.mrb[0].mxu0
      %v1529 = vadd.f32 %v1459, %v1528
      %v1530 = vpop.f32.mrb[0].mxu0
      %1531 = vdwg.mxu0
      %1532 = vmatprep.subr.mxu0 0.0
      %1533 = vmatpush1.msra.mxu0 %v1312
      %1534 = vmatprep.subr.mxu0 0.0
      %1535 = vmatpush1.msra.mxu0 %v1313
      %1536 = vmatprep.subr.mxu0 0.0
      %1537 = vmatpush1.msra.mxu0 %v1314
      %1538 = vmatprep.subr.mxu0 0.0
      %1539 = vmatpush1.msra.mxu0 %v1315
      %1540 = vmatprep.subr.mxu0 0.0
      %1541 = vmatpush1.msra.mxu0 %v1316
      %1542 = vmatprep.subr.mxu0 0.0
      %1543 = vmatpush1.msra.mxu0 %v1317
      %1544 = vmatprep.subr.mxu0 0.0
      %1545 = vmatpush1.msra.mxu0 %v1318
      %1546 = vmatprep.subr.mxu0 0.0
      %1547 = vmatpush1.msra.mxu0 %v1319
      %1548 = vmatprep.subr.mxu0 0.0
      %1549 = vmatpush1.msra.mxu0 %v1320
      %1550 = vmatprep.subr.mxu0 0.0
      %1551 = vmatpush1.msra.mxu0 %v1321
      %1552 = vmatprep.subr.mxu0 0.0
      %1553 = vmatpush1.msra.mxu0 %v1322
      %1554 = vmatprep.subr.mxu0 0.0
      %1555 = vmatpush1.msra.mxu0 %v1323
      %1556 = vmatprep.subr.mxu0 0.0
      %1557 = vmatpush1.msra.mxu0 %v1324
      %1558 = vmatprep.subr.mxu0 0.0
      %1559 = vmatpush1.msra.mxu0 %v1325
      %1560 = vmatprep.subr.mxu0 0.0
      %1561 = vmatpush1.msra.mxu0 %v1326
      %1562 = vmatprep.subr.mxu0 0.0
      %1563 = vmatpush1.msra.mxu0 %v1327
      %1564 = vmatprep.subr.mxu0 0.0
      %1565 = vmatpush1.msra.mxu0 %v1328
      %1566 = vmatprep.subr.mxu0 0.0
      %1567 = vmatpush1.msra.mxu0 %v1329
      %1568 = vmatprep.subr.mxu0 0.0
      %1569 = vmatpush1.msra.mxu0 %v1330
      %1570 = vmatprep.subr.mxu0 0.0
      %1571 = vmatpush1.msra.mxu0 %v1331
      %1572 = vmatprep.subr.mxu0 0.0
      %1573 = vmatpush1.msra.mxu0 %v1332
      %1574 = vmatprep.subr.mxu0 0.0
      %1575 = vmatpush1.msra.mxu0 %v1333
      %1576 = vmatprep.subr.mxu0 0.0
      %1577 = vmatpush1.msra.mxu0 %v1334
      %1578 = vmatprep.subr.mxu0 0.0
      %1579 = vmatpush1.msra.mxu0 %v1335
      %1580 = vmatprep.subr.mxu0 0.0
      %1581 = vmatpush1.msra.mxu0 %v1336
      %1582 = vmatprep.subr.mxu0 0.0
      %1583 = vmatpush1.msra.mxu0 %v1337
      %1584 = vmatprep.subr.mxu0 0.0
      %1585 = vmatpush1.msra.mxu0 %v1338
      %1586 = vmatprep.subr.mxu0 0.0
      %1587 = vmatpush1.msra.mxu0 %v1339
      %1588 = vmatprep.subr.mxu0 0.0
      %1589 = vmatpush1.msra.mxu0 %v1340
      %1590 = vmatprep.subr.mxu0 0.0
      %1591 = vmatpush1.msra.mxu0 %v1341
      %1592 = vmatprep.subr.mxu0 0.0
      %1593 = vmatpush1.msra.mxu0 %v1342
      %1594 = vmatprep.subr.mxu0 0.0
      %1595 = vmatpush1.msra.mxu0 %v1343
      %1596 = vmatprep.mubr.f32.mxu0 %v1386
      %1597 = vmatmul.mubr.f32.gmra.mrb[0].mxu0 %v1378
      %v1598 = vpop.f32.mrb[0].mxu0
      %v1599 = vadd.f32 %v1529, %v1598
      %v1600 = vpop.f32.mrb[0].mxu0
      %1601 = vdwg.mxu0
      %1602 = vmatprep.subr.mxu0 0.0
      %1603 = vmatpush1.msra.mxu0 %v1344
      %1604 = vmatprep.subr.mxu0 0.0
      %1605 = vmatpush1.msra.mxu0 %v1345
      %1606 = vmatprep.subr.mxu0 0.0
      %1607 = vmatpush1.msra.mxu0 %v1346
      %1608 = vmatprep.subr.mxu0 0.0
      %1609 = vmatpush1.msra.mxu0 %v1347
      %1610 = vmatprep.subr.mxu0 0.0
      %1611 = vmatpush1.msra.mxu0 %v1348
      %1612 = vmatprep.subr.mxu0 0.0
      %1613 = vmatpush1.msra.mxu0 %v1349
      %1614 = vmatprep.subr.mxu0 0.0
      %1615 = vmatpush1.msra.mxu0 %v1350
      %1616 = vmatprep.subr.mxu0 0.0
      %1617 = vmatpush1.msra.mxu0 %v1351
      %1618 = vmatprep.subr.mxu0 0.0
      %1619 = vmatpush1.msra.mxu0 %v1352
      %1620 = vmatprep.subr.mxu0 0.0
      %1621 = vmatpush1.msra.mxu0 %v1353
      %1622 = vmatprep.subr.mxu0 0.0
      %1623 = vmatpush1.msra.mxu0 %v1354
      %1624 = vmatprep.subr.mxu0 0.0
      %1625 = vmatpush1.msra.mxu0 %v1355
      %1626 = vmatprep.subr.mxu0 0.0
      %1627 = vmatpush1.msra.mxu0 %v1356
      %1628 = vmatprep.subr.mxu0 0.0
      %1629 = vmatpush1.msra.mxu0 %v1357
      %1630 = vmatprep.subr.mxu0 0.0
      %1631 = vmatpush1.msra.mxu0 %v1358
      %1632 = vmatprep.subr.mxu0 0.0
      %1633 = vmatpush1.msra.mxu0 %v1359
      %1634 = vmatprep.subr.mxu0 0.0
      %1635 = vmatpush1.msra.mxu0 %v1360
      %1636 = vmatprep.subr.mxu0 0.0
      %1637 = vmatpush1.msra.mxu0 %v1361
      %1638 = vmatprep.subr.mxu0 0.0
      %1639 = vmatpush1.msra.mxu0 %v1362
      %1640 = vmatprep.subr.mxu0 0.0
      %1641 = vmatpush1.msra.mxu0 %v1363
      %1642 = vmatprep.subr.mxu0 0.0
      %1643 = vmatpush1.msra.mxu0 %v1364
      %1644 = vmatprep.subr.mxu0 0.0
      %1645 = vmatpush1.msra.mxu0 %v1365
      %1646 = vmatprep.subr.mxu0 0.0
      %1647 = vmatpush1.msra.mxu0 %v1366
      %1648 = vmatprep.subr.mxu0 0.0
      %1649 = vmatpush1.msra.mxu0 %v1367
      %1650 = vmatprep.subr.mxu0 0.0
      %1651 = vmatpush1.msra.mxu0 %v1368
      %1652 = vmatprep.subr.mxu0 0.0
      %1653 = vmatpush1.msra.mxu0 %v1369
      %1654 = vmatprep.subr.mxu0 0.0
      %1655 = vmatpush1.msra.mxu0 %v1370
      %1656 = vmatprep.subr.mxu0 0.0
      %1657 = vmatpush1.msra.mxu0 %v1371
      %1658 = vmatprep.subr.mxu0 0.0
      %1659 = vmatpush1.msra.mxu0 %v1372
      %1660 = vmatprep.subr.mxu0 0.0
      %1661 = vmatpush1.msra.mxu0 %v1373
      %1662 = vmatprep.subr.mxu0 0.0
      %1663 = vmatpush1.msra.mxu0 %v1374
      %1664 = vmatprep.subr.mxu0 0.0
      %1665 = vmatpush1.msra.mxu0 %v1375
      %1666 = vmatprep.mubr.f32.mxu0 %v1387
      %1667 = vmatmul.mubr.f32.gmra.mrb[0].mxu0 %v1379
      %v1668 = vpop.f32.mrb[0].mxu0
      %v1669 = vadd.f32 %v1599, %v1668
      %v1670 = vpop.f32.mrb[0].mxu0
      %1671 = vdwg.mxu0
      %v1672 = vld [vmem:[%s374] sm:$0xff]
      %v1673 = vld [vmem:[%s374 + $0x8] sm:$0xff]
      %v1674 = vld [vmem:[%s374 + $0x10] sm:$0xff]
      %v1675 = vld [vmem:[%s374 + $0x18] sm:$0xff]
      %v1676 = vld [vmem:[%s374 + $0x20] sm:$0xff]
      %v1677 = vld [vmem:[%s374 + $0x28] sm:$0xff]
      %v1678 = vld [vmem:[%s374 + $0x30] sm:$0xff]
      %v1679 = vld [vmem:[%s374 + $0x38] sm:$0xff]
      %v1680 = vld [vmem:[%s374 + $0x40] sm:$0xff]
      %v1681 = vld [vmem:[%s374 + $0x48] sm:$0xff]
      %v1682 = vld [vmem:[%s374 + $0x50] sm:$0xff]
      %v1683 = vld [vmem:[%s374 + $0x58] sm:$0xff]
      %v1684 = vld [vmem:[%s374 + $0x60] sm:$0xff]
      %v1685 = vld [vmem:[%s374 + $0x68] sm:$0xff]
      %v1686 = vld [vmem:[%s374 + $0x70] sm:$0xff]
      %v1687 = vld [vmem:[%s374 + $0x78] sm:$0xff]
      %vm1688 = vcmask 261120
      %v1690 = vsel %vm1688, %v1669, 0
      %1692 = vmatprep.subr.mxu0 %v1673
      %1693 = vmatpush1.msra.mxu0 %v1672
      %1694 = vmatprep.subr.mxu0 %v1677
      %1695 = vmatpush1.msra.mxu0 %v1676
      %1696 = vmatprep.subr.mxu0 %v1681
      %1697 = vmatpush1.msra.mxu0 %v1680
      %1698 = vmatprep.subr.mxu0 %v1685
      %1699 = vmatpush1.msra.mxu0 %v1684
      %1700 = vmatprep.subr.mxu0 0.0
      %1701 = vmatpush1.msra.mxu0 0.0
      %1702 = vmatprep.subr.mxu0 0.0
      %1703 = vmatpush1.msra.mxu0 0.0
      %1704 = vmatprep.subr.mxu0 0.0
      %1705 = vmatpush1.msra.mxu0 0.0
      %1706 = vmatprep.subr.mxu0 0.0
      %1707 = vmatpush1.msra.mxu0 0.0
      %1708 = vmatprep.subr.mxu0 0.0
      %1709 = vmatpush1.msra.mxu0 0.0
      %1710 = vmatprep.subr.mxu0 0.0
      %1711 = vmatpush1.msra.mxu0 0.0
      %1712 = vmatprep.subr.mxu0 0.0
      %1713 = vmatpush1.msra.mxu0 0.0
      %1714 = vmatprep.subr.mxu0 0.0
      %1715 = vmatpush1.msra.mxu0 0.0
      %1716 = vmatprep.subr.mxu0 0.0
      %1717 = vmatpush1.msra.mxu0 0.0
      %1718 = vmatprep.subr.mxu0 0.0
      %1719 = vmatpush1.msra.mxu0 0.0
      %1720 = vmatprep.subr.mxu0 0.0
      %1721 = vmatpush1.msra.mxu0 0.0
      %1722 = vmatprep.subr.mxu0 0.0
      %1723 = vmatpush1.msra.mxu0 0.0
      %1724 = vmatprep.subr.mxu0 0.0
      %1725 = vmatpush1.msra.mxu0 0.0
      %1726 = vmatprep.subr.mxu0 0.0
      %1727 = vmatpush1.msra.mxu0 0.0
      %1728 = vmatprep.subr.mxu0 0.0
      %1729 = vmatpush1.msra.mxu0 0.0
      %1730 = vmatprep.subr.mxu0 0.0
      %1731 = vmatpush1.msra.mxu0 0.0
      %1732 = vmatprep.subr.mxu0 0.0
      %1733 = vmatpush1.msra.mxu0 0.0
      %1734 = vmatprep.subr.mxu0 0.0
      %1735 = vmatpush1.msra.mxu0 0.0
      %1736 = vmatprep.subr.mxu0 0.0
      %1737 = vmatpush1.msra.mxu0 0.0
      %1738 = vmatprep.subr.mxu0 0.0
      %1739 = vmatpush1.msra.mxu0 0.0
      %1740 = vmatprep.subr.mxu0 0.0
      %1741 = vmatpush1.msra.mxu0 0.0
      %1742 = vmatprep.subr.mxu0 0.0
      %1743 = vmatpush1.msra.mxu0 0.0
      %1744 = vmatprep.subr.mxu0 0.0
      %1745 = vmatpush1.msra.mxu0 0.0
      %1746 = vmatprep.subr.mxu0 0.0
      %1747 = vmatpush1.msra.mxu0 0.0
      %1748 = vmatprep.subr.mxu0 0.0
      %1749 = vmatpush1.msra.mxu0 0.0
      %1750 = vmatprep.subr.mxu0 0.0
      %1751 = vmatpush1.msra.mxu0 0.0
      %1752 = vmatprep.subr.mxu0 0.0
      %1753 = vmatpush1.msra.mxu0 0.0
      %1754 = vmatprep.subr.mxu0 0.0
      %1755 = vmatpush1.msra.mxu0 0.0
      %1756 = vmatprep.mubr.f32.mxu0 0.0
      %1757 = vmatmul.mubr.f32.gmra.mrb[0].mxu0 %v1690
      %v1758 = vpop.f32.mrb[0].mxu0
      %v1759 = vadd.f32 0.0, %v1758
      %v1760 = vpop.f32.mrb[0].mxu0
      %v1761 = vadd.f32 0.0, %v1760
      %1762 = vdwg.mxu0
      %1763 = vmatprep.subr.mxu0 %v1675
      %1764 = vmatpush1.msra.mxu0 %v1674
      %1765 = vmatprep.subr.mxu0 %v1679
      %1766 = vmatpush1.msra.mxu0 %v1678
      %1767 = vmatprep.subr.mxu0 %v1683
      %1768 = vmatpush1.msra.mxu0 %v1682
      %1769 = vmatprep.subr.mxu0 %v1687
      %1770 = vmatpush1.msra.mxu0 %v1686
      %1771 = vmatprep.subr.mxu0 0.0
      %1772 = vmatpush1.msra.mxu0 0.0
      %1773 = vmatprep.subr.mxu0 0.0
      %1774 = vmatpush1.msra.mxu0 0.0
      %1775 = vmatprep.subr.mxu0 0.0
      %1776 = vmatpush1.msra.mxu0 0.0
      %1777 = vmatprep.subr.mxu0 0.0
      %1778 = vmatpush1.msra.mxu0 0.0
      %1779 = vmatprep.subr.mxu0 0.0
      %1780 = vmatpush1.msra.mxu0 0.0
      %1781 = vmatprep.subr.mxu0 0.0
      %1782 = vmatpush1.msra.mxu0 0.0
      %1783 = vmatprep.subr.mxu0 0.0
      %1784 = vmatpush1.msra.mxu0 0.0
      %1785 = vmatprep.subr.mxu0 0.0
      %1786 = vmatpush1.msra.mxu0 0.0
      %1787 = vmatprep.subr.mxu0 0.0
      %1788 = vmatpush1.msra.mxu0 0.0
      %1789 = vmatprep.subr.mxu0 0.0
      %1790 = vmatpush1.msra.mxu0 0.0
      %1791 = vmatprep.subr.mxu0 0.0
      %1792 = vmatpush1.msra.mxu0 0.0
      %1793 = vmatprep.subr.mxu0 0.0
      %1794 = vmatpush1.msra.mxu0 0.0
      %1795 = vmatprep.subr.mxu0 0.0
      %1796 = vmatpush1.msra.mxu0 0.0
      %1797 = vmatprep.subr.mxu0 0.0
      %1798 = vmatpush1.msra.mxu0 0.0
      %1799 = vmatprep.subr.mxu0 0.0
      %1800 = vmatpush1.msra.mxu0 0.0
      %1801 = vmatprep.subr.mxu0 0.0
      %1802 = vmatpush1.msra.mxu0 0.0
      %1803 = vmatprep.subr.mxu0 0.0
      %1804 = vmatpush1.msra.mxu0 0.0
      %1805 = vmatprep.subr.mxu0 0.0
      %1806 = vmatpush1.msra.mxu0 0.0
      %1807 = vmatprep.subr.mxu0 0.0
      %1808 = vmatpush1.msra.mxu0 0.0
      %1809 = vmatprep.subr.mxu0 0.0
      %1810 = vmatpush1.msra.mxu0 0.0
      %1811 = vmatprep.subr.mxu0 0.0
      %1812 = vmatpush1.msra.mxu0 0.0
      %1813 = vmatprep.subr.mxu0 0.0
      %1814 = vmatpush1.msra.mxu0 0.0
      %1815 = vmatprep.subr.mxu0 0.0
      %1816 = vmatpush1.msra.mxu0 0.0
      %1817 = vmatprep.subr.mxu0 0.0
      %1818 = vmatpush1.msra.mxu0 0.0
      %1819 = vmatprep.subr.mxu0 0.0
      %1820 = vmatpush1.msra.mxu0 0.0
      %1821 = vmatprep.subr.mxu0 0.0
      %1822 = vmatpush1.msra.mxu0 0.0
      %1823 = vmatprep.subr.mxu0 0.0
      %1824 = vmatpush1.msra.mxu0 0.0
      %1825 = vmatprep.subr.mxu0 0.0
      %1826 = vmatpush1.msra.mxu0 0.0
      %1827 = vmatprep.mubr.f32.mxu0 0.0
      %1828 = vmatmul.mubr.f32.gmra.mrb[0].mxu0 %v1690
      %v1829 = vpop.f32.mrb[0].mxu0
      %v1830 = vadd.f32 0.0, %v1829
      %v1831 = vpop.f32.mrb[0].mxu0
      %v1832 = vadd.f32 0.0, %v1831
      %1833 = vdwg.mxu0
      %vm1834 = vcmask 1041408
      %v1835 = vsel %vm1834, %v1759, 0.0
      %v1836 = vrot.slane %v1835, 4
      %v1837 = vadd.f32 %v1835, %v1836
      %v1838 = vrot.slane %v1837, 2
      %v1839 = vadd.f32 %v1837, %v1838
      %v1840 = vrot.slane %v1839, 1
      %v1841 = vadd.f32 %v1839, %v1840
      %v1842 = vsel %vm1834, %v1761, 0.0
      %v1843 = vrot.slane %v1842, 4
      %v1844 = vadd.f32 %v1842, %v1843
      %v1845 = vrot.slane %v1844, 2
      %v1846 = vadd.f32 %v1844, %v1845
      %v1847 = vrot.slane %v1846, 1
      %v1848 = vadd.f32 %v1846, %v1847
      %v1849 = vsel %vm1834, %v1830, 0.0
      %v1850 = vrot.slane %v1849, 4
      %v1851 = vadd.f32 %v1849, %v1850
      %v1852 = vrot.slane %v1851, 2
      %v1853 = vadd.f32 %v1851, %v1852
      %v1854 = vrot.slane %v1853, 1
      %v1855 = vadd.f32 %v1853, %v1854
      %v1856 = vsel %vm1834, %v1832, 0.0
      %v1857 = vrot.slane %v1856, 4
      %v1858 = vadd.f32 %v1856, %v1857
      %v1859 = vrot.slane %v1858, 2
      %v1860 = vadd.f32 %v1858, %v1859
      %v1861 = vrot.slane %v1860, 1
      %v1862 = vadd.f32 %v1860, %v1861
      %v1863 = vrcp.pop 2.0
      %v1864 = vmul.f32 %v1841, %v1863
      %v1865 = vmul.f32 %v1848, %v1863
      %v1866 = vmul.f32 %v1855, %v1863
      %v1867 = vmul.f32 %v1862, %v1863
      %v1868 = vsub.f32 %v1759, %v1864
      %v1869 = vsub.f32 %v1761, %v1865
      %v1870 = vsub.f32 %v1830, %v1866
      %v1871 = vsub.f32 %v1832, %v1867
      %v1872 = vmul.f32 %v1868, %v1868
      %v1873 = vmul.f32 %v1869, %v1869
      %v1874 = vmul.f32 %v1870, %v1870
      %v1875 = vmul.f32 %v1871, %v1871
      %v1876 = vsel %vm1834, %v1872, 0.0
      %v1877 = vrot.slane %v1876, 4
      %v1878 = vadd.f32 %v1876, %v1877
      %v1879 = vrot.slane %v1878, 2
      %v1880 = vadd.f32 %v1878, %v1879
      %v1881 = vrot.slane %v1880, 1
      %v1882 = vadd.f32 %v1880, %v1881
      %v1883 = vsel %vm1834, %v1873, 0.0
      %v1884 = vrot.slane %v1883, 4
      %v1885 = vadd.f32 %v1883, %v1884
      %v1886 = vrot.slane %v1885, 2
      %v1887 = vadd.f32 %v1885, %v1886
      %v1888 = vrot.slane %v1887, 1
      %v1889 = vadd.f32 %v1887, %v1888
      %v1890 = vsel %vm1834, %v1874, 0.0
      %v1891 = vrot.slane %v1890, 4
      %v1892 = vadd.f32 %v1890, %v1891
      %v1893 = vrot.slane %v1892, 2
      %v1894 = vadd.f32 %v1892, %v1893
      %v1895 = vrot.slane %v1894, 1
      %v1896 = vadd.f32 %v1894, %v1895
      %v1897 = vsel %vm1834, %v1875, 0.0
      %v1898 = vrot.slane %v1897, 4
      %v1899 = vadd.f32 %v1897, %v1898
      %v1900 = vrot.slane %v1899, 2
      %v1901 = vadd.f32 %v1899, %v1900
      %v1902 = vrot.slane %v1901, 1
      %v1903 = vadd.f32 %v1901, %v1902
      %v1904 = vmul.f32 %v1882, %v1863
      %v1905 = vmul.f32 %v1889, %v1863
      %v1906 = vmul.f32 %v1896, %v1863
      %v1907 = vmul.f32 %v1903, %v1863
      %v1908 = vadd.f32 %v1904, 1e-05
      %v1909 = vadd.f32 %v1905, 1e-05
      %v1910 = vadd.f32 %v1906, 1e-05
      %v1911 = vadd.f32 %v1907, 1e-05
      %v1912 = vrsqrt.pop %v1908
      %v1913 = vrsqrt.pop %v1909
      %v1914 = vrsqrt.pop %v1910
      %v1915 = vrsqrt.pop %v1911
      %v1916 = vmul.f32 %v1868, %v1912
      %v1917 = vmul.f32 %v1869, %v1913
      %v1918 = vmul.f32 %v1870, %v1914
      %v1919 = vmul.f32 %v1871, %v1915
      %v1924 = vrot.slane %v1759, 2
      %v1925 = vrot.slane %v1761, 2
      %v1926 = vrot.slane %v1830, 2
      %v1927 = vrot.slane %v1832, 2
      %v1932 = vsel %vm1834, %v1924, 0.0
      %v1933 = vrot.slane %v1932, 4
      %v1934 = vadd.f32 %v1932, %v1933
      %v1935 = vrot.slane %v1934, 2
      %v1936 = vadd.f32 %v1934, %v1935
      %v1937 = vrot.slane %v1936, 1
      %v1938 = vadd.f32 %v1936, %v1937
      %v1939 = vsel %vm1834, %v1925, 0.0
      %v1940 = vrot.slane %v1939, 4
      %v1941 = vadd.f32 %v1939, %v1940
      %v1942 = vrot.slane %v1941, 2
      %v1943 = vadd.f32 %v1941, %v1942
      %v1944 = vrot.slane %v1943, 1
      %v1945 = vadd.f32 %v1943, %v1944
      %v1946 = vsel %vm1834, %v1926, 0.0
      %v1947 = vrot.slane %v1946, 4
      %v1948 = vadd.f32 %v1946, %v1947
      %v1949 = vrot.slane %v1948, 2
      %v1950 = vadd.f32 %v1948, %v1949
      %v1951 = vrot.slane %v1950, 1
      %v1952 = vadd.f32 %v1950, %v1951
      %v1953 = vsel %vm1834, %v1927, 0.0
      %v1954 = vrot.slane %v1953, 4
      %v1955 = vadd.f32 %v1953, %v1954
      %v1956 = vrot.slane %v1955, 2
      %v1957 = vadd.f32 %v1955, %v1956
      %v1958 = vrot.slane %v1957, 1
      %v1959 = vadd.f32 %v1957, %v1958
      %v1960 = vmul.f32 %v1938, %v1863
      %v1961 = vmul.f32 %v1945, %v1863
      %v1962 = vmul.f32 %v1952, %v1863
      %v1963 = vmul.f32 %v1959, %v1863
      %v1964 = vsub.f32 %v1759, %v1960
      %v1965 = vsub.f32 %v1761, %v1961
      %v1966 = vsub.f32 %v1830, %v1962
      %v1967 = vsub.f32 %v1832, %v1963
      %v1968 = vmul.f32 %v1964, %v1964
      %v1969 = vmul.f32 %v1965, %v1965
      %v1970 = vmul.f32 %v1966, %v1966
      %v1971 = vmul.f32 %v1967, %v1967
      %v1976 = vrot.slane %v1968, 2
      %v1977 = vrot.slane %v1969, 2
      %v1978 = vrot.slane %v1970, 2
      %v1979 = vrot.slane %v1971, 2
      %v1984 = vsel %vm1834, %v1976, 0.0
      %v1985 = vrot.slane %v1984, 4
      %v1986 = vadd.f32 %v1984, %v1985
      %v1987 = vrot.slane %v1986, 2
      %v1988 = vadd.f32 %v1986, %v1987
      %v1989 = vrot.slane %v1988, 1
      %v1990 = vadd.f32 %v1988, %v1989
      %v1991 = vsel %vm1834, %v1977, 0.0
      %v1992 = vrot.slane %v1991, 4
      %v1993 = vadd.f32 %v1991, %v1992
      %v1994 = vrot.slane %v1993, 2
      %v1995 = vadd.f32 %v1993, %v1994
      %v1996 = vrot.slane %v1995, 1
      %v1997 = vadd.f32 %v1995, %v1996
      %v1998 = vsel %vm1834, %v1978, 0.0
      %v1999 = vrot.slane %v1998, 4
      %v2000 = vadd.f32 %v1998, %v1999
      %v2001 = vrot.slane %v2000, 2
      %v2002 = vadd.f32 %v2000, %v2001
      %v2003 = vrot.slane %v2002, 1
      %v2004 = vadd.f32 %v2002, %v2003
      %v2005 = vsel %vm1834, %v1979, 0.0
      %v2006 = vrot.slane %v2005, 4
      %v2007 = vadd.f32 %v2005, %v2006
      %v2008 = vrot.slane %v2007, 2
      %v2009 = vadd.f32 %v2007, %v2008
      %v2010 = vrot.slane %v2009, 1
      %v2011 = vadd.f32 %v2009, %v2010
      %v2012 = vmul.f32 %v1990, %v1863
      %v2013 = vmul.f32 %v1997, %v1863
      %v2014 = vmul.f32 %v2004, %v1863
      %v2015 = vmul.f32 %v2011, %v1863
      %v2016 = vadd.f32 %v2012, 1e-05
      %v2017 = vadd.f32 %v2013, 1e-05
      %v2018 = vadd.f32 %v2014, 1e-05
      %v2019 = vadd.f32 %v2015, 1e-05
      %v2020 = vrsqrt.pop %v2016
      %v2021 = vrsqrt.pop %v2017
      %v2022 = vrsqrt.pop %v2018
      %v2023 = vrsqrt.pop %v2019
      %v2024 = vmul.f32 %v1964, %v2020
      %v2025 = vmul.f32 %v1965, %v2021
      %v2026 = vmul.f32 %v1966, %v2022
      %v2027 = vmul.f32 %v1967, %v2023
      %v2028 = vsel %vm1834, %v1916, %v2024
      %v2029 = vsel %vm1834, %v1917, %v2025
      %v2030 = vsel %vm1834, %v1918, %v2026
      %v2031 = vsel %vm1834, %v1919, %v2027
      %v2032 = vld [vmem:[%s378] sm:$0xf]
      %v2034 = vlaneseq
      %v2035 = vshrl.u32 %v2034, 7
      %v2036 = vsub.s32 0, %v2035
      %v2037 = vrot.slane %v2032, %v2036
      %v2038 = vlaneseq
      %v2039 = vshrl.u32 %v2038, 7
      %v2040 = vsub.s32 1, %v2039
      %v2041 = vrot.slane %v2032, %v2040
      %v2042 = vlaneseq
      %v2043 = vshrl.u32 %v2042, 7
      %v2044 = vsub.s32 2, %v2043
      %v2045 = vrot.slane %v2032, %v2044
      %v2046 = vlaneseq
      %v2047 = vshrl.u32 %v2046, 7
      %v2048 = vsub.s32 3, %v2047
      %v2049 = vrot.slane %v2032, %v2048
      %v2054 = vmul.f32 %v2028, %v2037
      %v2055 = vmul.f32 %v2029, %v2041
      %v2056 = vmul.f32 %v2030, %v2045
      %v2057 = vmul.f32 %v2031, %v2049
      %v2058 = vld [vmem:[%s382] sm:$0xf]
      %v2060 = vlaneseq
      %v2061 = vshrl.u32 %v2060, 7
      %v2062 = vsub.s32 0, %v2061
      %v2063 = vrot.slane %v2058, %v2062
      %v2064 = vlaneseq
      %v2065 = vshrl.u32 %v2064, 7
      %v2066 = vsub.s32 1, %v2065
      %v2067 = vrot.slane %v2058, %v2066
      %v2068 = vlaneseq
      %v2069 = vshrl.u32 %v2068, 7
      %v2070 = vsub.s32 2, %v2069
      %v2071 = vrot.slane %v2058, %v2070
      %v2072 = vlaneseq
      %v2073 = vshrl.u32 %v2072, 7
      %v2074 = vsub.s32 3, %v2073
      %v2075 = vrot.slane %v2058, %v2074
      %v2080 = vadd.f32 %v2054, %v2063
      %v2081 = vadd.f32 %v2055, %v2067
      %v2082 = vadd.f32 %v2056, %v2071
      %v2083 = vadd.f32 %v2057, %v2075
      %v2084 = vmax.f32 %v2080, 0.0
      %v2085 = vmax.f32 %v2081, 0.0
      %v2086 = vmax.f32 %v2082, 0.0
      %v2087 = vmax.f32 %v2083, 0.0
      %v2088 = vld [vmem:[%s387] sm:$0xff]
      %v2089 = vld [vmem:[%s387 + $0x8] sm:$0xff]
      %v2090 = vld [vmem:[%s387 + $0x10] sm:$0xff]
      %v2091 = vld [vmem:[%s387 + $0x18] sm:$0xff]
      %v2092 = vld [vmem:[%s387 + $0x20] sm:$0xff]
      %v2093 = vld [vmem:[%s387 + $0x28] sm:$0xff]
      %v2094 = vld [vmem:[%s387 + $0x30] sm:$0xff]
      %v2095 = vld [vmem:[%s387 + $0x38] sm:$0xff]
      %v2096 = vld [vmem:[%s387 + $0x40] sm:$0xff]
      %v2097 = vld [vmem:[%s387 + $0x48] sm:$0xff]
      %v2098 = vld [vmem:[%s387 + $0x50] sm:$0xff]
      %v2099 = vld [vmem:[%s387 + $0x58] sm:$0xff]
      %v2100 = vld [vmem:[%s387 + $0x60] sm:$0xff]
      %v2101 = vld [vmem:[%s387 + $0x68] sm:$0xff]
      %v2102 = vld [vmem:[%s387 + $0x70] sm:$0xff]
      %v2103 = vld [vmem:[%s387 + $0x78] sm:$0xff]
      %v2104 = vld [vmem:[%s387 + $0x80] sm:$0xff]
      %v2105 = vld [vmem:[%s387 + $0x88] sm:$0xff]
      %v2106 = vld [vmem:[%s387 + $0x90] sm:$0xff]
      %v2107 = vld [vmem:[%s387 + $0x98] sm:$0xff]
      %v2108 = vld [vmem:[%s387 + $0xa0] sm:$0xff]
      %v2109 = vld [vmem:[%s387 + $0xa8] sm:$0xff]
      %v2110 = vld [vmem:[%s387 + $0xb0] sm:$0xff]
      %v2111 = vld [vmem:[%s387 + $0xb8] sm:$0xff]
      %v2112 = vld [vmem:[%s387 + $0xc0] sm:$0xff]
      %v2113 = vld [vmem:[%s387 + $0xc8] sm:$0xff]
      %v2114 = vld [vmem:[%s387 + $0xd0] sm:$0xff]
      %v2115 = vld [vmem:[%s387 + $0xd8] sm:$0xff]
      %v2116 = vld [vmem:[%s387 + $0xe0] sm:$0xff]
      %v2117 = vld [vmem:[%s387 + $0xe8] sm:$0xff]
      %v2118 = vld [vmem:[%s387 + $0xf0] sm:$0xff]
      %v2119 = vld [vmem:[%s387 + $0xf8] sm:$0xff]
      %v2120 = vld [vmem:[%s387 + $0x100] sm:$0xff]
      %v2121 = vld [vmem:[%s387 + $0x108] sm:$0xff]
      %v2122 = vld [vmem:[%s387 + $0x110] sm:$0xff]
      %v2123 = vld [vmem:[%s387 + $0x118] sm:$0xff]
      %v2124 = vld [vmem:[%s387 + $0x120] sm:$0xff]
      %v2125 = vld [vmem:[%s387 + $0x128] sm:$0xff]
      %v2126 = vld [vmem:[%s387 + $0x130] sm:$0xff]
      %v2127 = vld [vmem:[%s387 + $0x138] sm:$0xff]
      %v2128 = vld [vmem:[%s387 + $0x140] sm:$0xff]
      %v2129 = vld [vmem:[%s387 + $0x148] sm:$0xff]
      %v2130 = vld [vmem:[%s387 + $0x150] sm:$0xff]
      %v2131 = vld [vmem:[%s387 + $0x158] sm:$0xff]
      %v2132 = vld [vmem:[%s387 + $0x160] sm:$0xff]
      %v2133 = vld [vmem:[%s387 + $0x168] sm:$0xff]
      %v2134 = vld [vmem:[%s387 + $0x170] sm:$0xff]
      %v2135 = vld [vmem:[%s387 + $0x178] sm:$0xff]
      %v2136 = vld [vmem:[%s387 + $0x180] sm:$0xff]
      %v2137 = vld [vmem:[%s387 + $0x188] sm:$0xff]
      %v2138 = vld [vmem:[%s387 + $0x190] sm:$0xff]
      %v2139 = vld [vmem:[%s387 + $0x198] sm:$0xff]
      %v2140 = vld [vmem:[%s387 + $0x1a0] sm:$0xff]
      %v2141 = vld [vmem:[%s387 + $0x1a8] sm:$0xff]
      %v2142 = vld [vmem:[%s387 + $0x1b0] sm:$0xff]
      %v2143 = vld [vmem:[%s387 + $0x1b8] sm:$0xff]
      %v2144 = vld [vmem:[%s387 + $0x1c0] sm:$0xff]
      %v2145 = vld [vmem:[%s387 + $0x1c8] sm:$0xff]
      %v2146 = vld [vmem:[%s387 + $0x1d0] sm:$0xff]
      %v2147 = vld [vmem:[%s387 + $0x1d8] sm:$0xff]
      %v2148 = vld [vmem:[%s387 + $0x1e0] sm:$0xff]
      %v2149 = vld [vmem:[%s387 + $0x1e8] sm:$0xff]
      %v2150 = vld [vmem:[%s387 + $0x1f0] sm:$0xff]
      %v2151 = vld [vmem:[%s387 + $0x1f8] sm:$0xff]
      %2152 = vmatprep.subr.mxu0 0.0
      %2153 = vmatpush1.msra.mxu0 %v2088
      %2154 = vmatprep.subr.mxu0 0.0
      %2155 = vmatpush1.msra.mxu0 %v2089
      %2156 = vmatprep.subr.mxu0 0.0
      %2157 = vmatpush1.msra.mxu0 %v2090
      %2158 = vmatprep.subr.mxu0 0.0
      %2159 = vmatpush1.msra.mxu0 %v2091
      %2160 = vmatprep.subr.mxu0 0.0
      %2161 = vmatpush1.msra.mxu0 %v2092
      %2162 = vmatprep.subr.mxu0 0.0
      %2163 = vmatpush1.msra.mxu0 %v2093
      %2164 = vmatprep.subr.mxu0 0.0
      %2165 = vmatpush1.msra.mxu0 %v2094
      %2166 = vmatprep.subr.mxu0 0.0
      %2167 = vmatpush1.msra.mxu0 %v2095
      %2168 = vmatprep.subr.mxu0 0.0
      %2169 = vmatpush1.msra.mxu0 %v2096
      %2170 = vmatprep.subr.mxu0 0.0
      %2171 = vmatpush1.msra.mxu0 %v2097
      %2172 = vmatprep.subr.mxu0 0.0
      %2173 = vmatpush1.msra.mxu0 %v2098
      %2174 = vmatprep.subr.mxu0 0.0
      %2175 = vmatpush1.msra.mxu0 %v2099
      %2176 = vmatprep.subr.mxu0 0.0
      %2177 = vmatpush1.msra.mxu0 %v2100
      %2178 = vmatprep.subr.mxu0 0.0
      %2179 = vmatpush1.msra.mxu0 %v2101
      %2180 = vmatprep.subr.mxu0 0.0
      %2181 = vmatpush1.msra.mxu0 %v2102
      %2182 = vmatprep.subr.mxu0 0.0
      %2183 = vmatpush1.msra.mxu0 %v2103
      %2184 = vmatprep.subr.mxu0 0.0
      %2185 = vmatpush1.msra.mxu0 %v2104
      %2186 = vmatprep.subr.mxu0 0.0
      %2187 = vmatpush1.msra.mxu0 %v2105
      %2188 = vmatprep.subr.mxu0 0.0
      %2189 = vmatpush1.msra.mxu0 %v2106
      %2190 = vmatprep.subr.mxu0 0.0
      %2191 = vmatpush1.msra.mxu0 %v2107
      %2192 = vmatprep.subr.mxu0 0.0
      %2193 = vmatpush1.msra.mxu0 %v2108
      %2194 = vmatprep.subr.mxu0 0.0
      %2195 = vmatpush1.msra.mxu0 %v2109
      %2196 = vmatprep.subr.mxu0 0.0
      %2197 = vmatpush1.msra.mxu0 %v2110
      %2198 = vmatprep.subr.mxu0 0.0
      %2199 = vmatpush1.msra.mxu0 %v2111
      %2200 = vmatprep.subr.mxu0 0.0
      %2201 = vmatpush1.msra.mxu0 %v2112
      %2202 = vmatprep.subr.mxu0 0.0
      %2203 = vmatpush1.msra.mxu0 %v2113
      %2204 = vmatprep.subr.mxu0 0.0
      %2205 = vmatpush1.msra.mxu0 %v2114
      %2206 = vmatprep.subr.mxu0 0.0
      %2207 = vmatpush1.msra.mxu0 %v2115
      %2208 = vmatprep.subr.mxu0 0.0
      %2209 = vmatpush1.msra.mxu0 %v2116
      %2210 = vmatprep.subr.mxu0 0.0
      %2211 = vmatpush1.msra.mxu0 %v2117
      %2212 = vmatprep.subr.mxu0 0.0
      %2213 = vmatpush1.msra.mxu0 %v2118
      %2214 = vmatprep.subr.mxu0 0.0
      %2215 = vmatpush1.msra.mxu0 %v2119
      %2216 = vmatprep.mubr.f32.mxu0 %v2085
      %2217 = vmatmul.mubr.f32.gmra.mrb[0].mxu0 %v2084
      %v2218 = vpop.f32.mrb[0].mxu0
      %v2219 = vadd.f32 0.0, %v2218
      %v2220 = vpop.f32.mrb[0].mxu0
      %2221 = vdwg.mxu0
      %2222 = vmatprep.subr.mxu0 0.0
      %2223 = vmatpush1.msra.mxu0 %v2120
      %2224 = vmatprep.subr.mxu0 0.0
      %2225 = vmatpush1.msra.mxu0 %v2121
      %2226 = vmatprep.subr.mxu0 0.0
      %2227 = vmatpush1.msra.mxu0 %v2122
      %2228 = vmatprep.subr.mxu0 0.0
      %2229 = vmatpush1.msra.mxu0 %v2123
      %2230 = vmatprep.subr.mxu0 0.0
      %2231 = vmatpush1.msra.mxu0 %v2124
      %2232 = vmatprep.subr.mxu0 0.0
      %2233 = vmatpush1.msra.mxu0 %v2125
      %2234 = vmatprep.subr.mxu0 0.0
      %2235 = vmatpush1.msra.mxu0 %v2126
      %2236 = vmatprep.subr.mxu0 0.0
      %2237 = vmatpush1.msra.mxu0 %v2127
      %2238 = vmatprep.subr.mxu0 0.0
      %2239 = vmatpush1.msra.mxu0 %v2128
      %2240 = vmatprep.subr.mxu0 0.0
      %2241 = vmatpush1.msra.mxu0 %v2129
      %2242 = vmatprep.subr.mxu0 0.0
      %2243 = vmatpush1.msra.mxu0 %v2130
      %2244 = vmatprep.subr.mxu0 0.0
      %2245 = vmatpush1.msra.mxu0 %v2131
      %2246 = vmatprep.subr.mxu0 0.0
      %2247 = vmatpush1.msra.mxu0 %v2132
      %2248 = vmatprep.subr.mxu0 0.0
      %2249 = vmatpush1.msra.mxu0 %v2133
      %2250 = vmatprep.subr.mxu0 0.0
      %2251 = vmatpush1.msra.mxu0 %v2134
      %2252 = vmatprep.subr.mxu0 0.0
      %2253 = vmatpush1.msra.mxu0 %v2135
      %2254 = vmatprep.subr.mxu0 0.0
      %2255 = vmatpush1.msra.mxu0 %v2136
      %2256 = vmatprep.subr.mxu0 0.0
      %2257 = vmatpush1.msra.mxu0 %v2137
      %2258 = vmatprep.subr.mxu0 0.0
      %2259 = vmatpush1.msra.mxu0 %v2138
      %2260 = vmatprep.subr.mxu0 0.0
      %2261 = vmatpush1.msra.mxu0 %v2139
      %2262 = vmatprep.subr.mxu0 0.0
      %2263 = vmatpush1.msra.mxu0 %v2140
      %2264 = vmatprep.subr.mxu0 0.0
      %2265 = vmatpush1.msra.mxu0 %v2141
      %2266 = vmatprep.subr.mxu0 0.0
      %2267 = vmatpush1.msra.mxu0 %v2142
      %2268 = vmatprep.subr.mxu0 0.0
      %2269 = vmatpush1.msra.mxu0 %v2143
      %2270 = vmatprep.subr.mxu0 0.0
      %2271 = vmatpush1.msra.mxu0 %v2144
      %2272 = vmatprep.subr.mxu0 0.0
      %2273 = vmatpush1.msra.mxu0 %v2145
      %2274 = vmatprep.subr.mxu0 0.0
      %2275 = vmatpush1.msra.mxu0 %v2146
      %2276 = vmatprep.subr.mxu0 0.0
      %2277 = vmatpush1.msra.mxu0 %v2147
      %2278 = vmatprep.subr.mxu0 0.0
      %2279 = vmatpush1.msra.mxu0 %v2148
      %2280 = vmatprep.subr.mxu0 0.0
      %2281 = vmatpush1.msra.mxu0 %v2149
      %2282 = vmatprep.subr.mxu0 0.0
      %2283 = vmatpush1.msra.mxu0 %v2150
      %2284 = vmatprep.subr.mxu0 0.0
      %2285 = vmatpush1.msra.mxu0 %v2151
      %2286 = vmatprep.mubr.f32.mxu0 %v2087
      %2287 = vmatmul.mubr.f32.gmra.mrb[0].mxu0 %v2086
      %v2288 = vpop.f32.mrb[0].mxu0
      %v2289 = vadd.f32 %v2219, %v2288
      %v2290 = vpop.f32.mrb[0].mxu0
      %2291 = vdwg.mxu0
      %2292 = vst [vmem:[%s391] sm:$0xf] %v2289
      %p2293 = scmp.lt.s32.totalorder %s19, 1
      %s2294 = scalar_select %p2293, %s19, 1
      %s2295 = smul.addr %s2294, 4
      %s2296 = scalar_lea.vmem %s8, %s2295
      // Predicated region
      $region53: #{relic_forward.1} parent=51 // pred_check
        %p2297 = pneg %p235
      $region54: #{relic_forward.1} parent=51 // pred_check_branch
        %2299 = sbr.rel (%p2297) target = $region56
      $region55: #{relic_forward.1} parent=51 // pred_region
        _
      $region56: #{relic_forward.1} parent=51 // pred_fallthru
        _
    $region52: #{relic_forward.1} parent=5 // pred_fallthru
      _
    %p2300 = scmp.le.s32.totalorder 2, %s14
    // Predicated region
    $region57: #{relic_forward.1} parent=5 // pred_check
      %p2301 = pneg %p2300
    $region58: #{relic_forward.1} parent=5 // pred_check_branch
      %2303 = sbr.rel (%p2301) target = $region60
    $region59: #{relic_forward.1} parent=5 // pred_region
      %s2304 = ssub.s32 %s14, 2
      // Predicated region
      $region61: #{relic_forward.1} parent=59 // pred_check
        %p2305 = pneg %p241
      $region62: #{relic_forward.1} parent=59 // pred_check_branch
        %2307 = sbr.rel (%p2305) target = $region64
      $region63: #{relic_forward.1} parent=59 // pred_region
        %p2308 = scmp.lt.s32.totalorder %s20, 1
        %s2309 = scalar_select %p2308, %s20, 1
        %s2310 = smul.addr %s2309, 4
        %s2311 = scalar_lea.vmem %s8, %s2310
      $region64: #{relic_forward.1} parent=59 // pred_fallthru
        _
    $region60: #{relic_forward.1} parent=5 // pred_fallthru
      _
  $region6: #{relic_forward.1} parent=0 // loop_footer
    %s18 = sadd.s32 1, %s14
  $region7: #{relic_forward.1} parent=0 // loop_footer_branch
    %13 = sbr.rel target = $region3
  $region8: #{relic_forward.1} parent=0 // loop_exit
    _

</llo_original>
